<compile_context>
chip_gen: v7x
topology: tpu7x:2x2x1
jax: 0.10.0
libtpu: 0.0.40
codegen_flags: <defaults>
</compile_context>

<pallas_src>
import jax
import jax.numpy as jnp
from jax.experimental import pallas as pl
from jax.experimental.pallas import tpu as pltpu

IN_FEATURES = 1000
OUT_FEATURES = 1000
IN_PAD = 1024    # next multiple of 128 lanes
OUT_PAD = 1024
TN = 512         # output tile width -> 2 column tiles (keep tiles big: ~0.35us/step)
TM_MAX = 256     # cap on batch tile rows so large batches stay within VMEM


def linear_kernel(x_ref, wt_ref, b_ref, o_ref):
    # x_ref: (TM, IN_PAD) batch tile; wt_ref: (IN_PAD, TN) weight column tile;
    # b_ref: (1, TN) bias tile; o_ref: (TM, TN) output tile.
    acc = jnp.dot(x_ref[...], wt_ref[...], preferred_element_type=jnp.float32)
    o_ref[...] = (acc + b_ref[...]).astype(o_ref.dtype)


def pack_linear_params(weight, bias):
    """One-time packing (outside the hot path).

    weight: PyTorch-layout (OUT, IN) f32 -> padded transposed slab (IN_PAD, OUT_PAD)
    bias:   (OUT,) f32                   -> lane-dense (1, OUT_PAD)
    Zero padding keeps x @ Wt exact on the real 1000 columns.
    """
    wt = jnp.zeros((IN_PAD, OUT_PAD), dtype=weight.dtype)
    wt = wt.at[:IN_FEATURES, :OUT_FEATURES].set(weight.T)
    b2 = jnp.zeros((1, OUT_PAD), dtype=bias.dtype)
    b2 = b2.at[0, :OUT_FEATURES].set(bias)
    return wt, b2


@jax.jit
def linear_pallas(x, wt_packed, b_packed):
    """x: (B, IN_FEATURES) f32; wt_packed: (IN_PAD, OUT_PAD); b_packed: (1, OUT_PAD)."""
    B = x.shape[0]
    b8 = ((B + 7) // 8) * 8                 # sublane-aligned batch
    TM = b8 if b8 <= TM_MAX else TM_MAX     # single batch tile at small B
    Bp = ((b8 + TM - 1) // TM) * TM         # batch padded to a multiple of TM

    # Pad x to (Bp, IN_PAD). Tiny (~32 KB at B=8) vs. the 4 MB weight read.
    x_pad = jnp.zeros((Bp, IN_PAD), dtype=x.dtype)
    x_pad = x_pad.at[:B, :IN_FEATURES].set(x)

    itemsize = jnp.dtype(x.dtype).itemsize
    n_batch_tiles = Bp // TM
    cost = pl.CostEstimate(
        flops=2 * Bp * IN_PAD * OUT_PAD,
        transcendentals=0,
        bytes_accessed=(x_pad.size
                        + wt_packed.size * n_batch_tiles
                        + b_packed.size
                        + Bp * OUT_PAD) * itemsize,
    )

    y_pad = pl.pallas_call(
        linear_kernel,
        out_shape=jax.ShapeDtypeStruct((Bp, OUT_PAD), x.dtype),
        grid_spec=pltpu.PrefetchScalarGridSpec(
            num_scalar_prefetch=0,
            grid=(n_batch_tiles, OUT_PAD // TN),
            in_specs=[
                pl.BlockSpec((TM, IN_PAD), lambda i, j: (i, 0)),   # x batch tile (resident over j)
                pl.BlockSpec((IN_PAD, TN), lambda i, j: (0, j)),   # weight column tile (streams)
                pl.BlockSpec((1, TN), lambda i, j: (0, j)),        # bias tile
            ],
            out_specs=pl.BlockSpec((TM, TN), lambda i, j: (i, j)),
        ),
        compiler_params=pltpu.CompilerParams(
            dimension_semantics=("parallel", "parallel"),  # independent tiles; megacore on v7x
        ),
        cost_estimate=cost,
    )(x_pad, wt_packed, b_packed)

    return y_pad[:B, :OUT_FEATURES]


if __name__ == "__main__":
    key = jax.random.PRNGKey(0)
    kx, kw, kb = jax.random.split(key, 3)

    B = 8  # small batch; feature dims fixed at 1000 by the module definition
    x = jax.random.normal(kx, (B, IN_FEATURES), dtype=jnp.float32)

    # Deterministic parameter init (mimics nn.Linear's uniform(-1/sqrt(in), 1/sqrt(in)))
    bound = 1.0 / (IN_FEATURES ** 0.5)
    weight = jax.random.uniform(
        kw, (OUT_FEATURES, IN_FEATURES), dtype=jnp.float32, minval=-bound, maxval=bound
    )
    bias = jax.random.uniform(
        kb, (OUT_FEATURES,), dtype=jnp.float32, minval=-bound, maxval=bound
    )

    # One-time packing (transposed + padded weight, lane-dense bias)
    wt_packed, b_packed = pack_linear_params(weight, bias)
    wt_packed, b_packed = jax.block_until_ready((wt_packed, b_packed))

    y = linear_pallas(x, wt_packed, b_packed)
    jax.block_until_ready(y)

    # Cross-check against plain-JAX reference
    y_ref = x @ weight.T + bias
    assert y.shape == (B, OUT_FEATURES)
    assert jnp.allclose(y, y_ref, atol=1e-4, rtol=1e-4)

    print("KERNEL_OK")
</pallas_src>

<mosaic_0001>
module attributes {stable_mosaic.version = 11 : i64} {
  func.func @linear_kernel(%arg0: i32, %arg1: i32, %arg2: memref<8x1024xf32, #tpu.memory_space<vmem>>, %arg3: memref<1024x512xf32, #tpu.memory_space<vmem>>, %arg4: memref<1x512xf32, #tpu.memory_space<vmem>>, %arg5: memref<8x512xf32, #tpu.memory_space<vmem>>) attributes {dimension_semantics = [#tpu.dimension_semantics<parallel>, #tpu.dimension_semantics<parallel>], iteration_bounds = array<i64: 1, 2>, scalar_prefetch = 0 : i64, scratch_operands = 0 : i64, tpu.core_type = #tpu.core_type<tc>, window_params = [{transform_indices = @transform_0, window_bounds = array<i64: 8, 1024>}, {transform_indices = @transform_1, window_bounds = array<i64: 1024, 512>}, {transform_indices = @transform_2, window_bounds = array<i64: 1, 512>}, {transform_indices = @transform_3, window_bounds = array<i64: 8, 512>}]} {
    %c0 = arith.constant 0 : index
    %c0_0 = arith.constant 0 : index
    %0 = vector.load %arg2[%c0, %c0_0] : memref<8x1024xf32, #tpu.memory_space<vmem>>, vector<8x1024xf32>
    %c0_1 = arith.constant 0 : index
    %c0_2 = arith.constant 0 : index
    %1 = vector.load %arg3[%c0_1, %c0_2] : memref<1024x512xf32, #tpu.memory_space<vmem>>, vector<1024x512xf32>
    %cst = arith.constant dense<0.000000e+00> : vector<8x512xf32>
    %2 = tpu.matmul %0, %1, %cst {dimension_numbers = #tpu.dot_dimension_numbers<[1], [0], [0], [1], [0, 0, 1, 1], [], []>} : vector<8x1024xf32>, vector<1024x512xf32>, vector<8x512xf32> -> vector<8x512xf32>
    %c0_3 = arith.constant 0 : index
    %c0_4 = arith.constant 0 : index
    %3 = vector.load %arg4[%c0_3, %c0_4] : memref<1x512xf32, #tpu.memory_space<vmem>>, vector<1x512xf32>
    %4 = vector.broadcast %3 : vector<1x512xf32> to vector<8x512xf32>
    %5 = arith.addf %2, %4 : vector<8x512xf32>
    %c0_5 = arith.constant 0 : index
    %c0_6 = arith.constant 0 : index
    %6 = vector.load %arg5[%c0_5, %c0_6] : memref<8x512xf32, #tpu.memory_space<vmem>>, vector<8x512xf32>
    tpu.vector_store %arg5[%c0_5, %c0_6], %5 {strides = array<i32>} : memref<8x512xf32, #tpu.memory_space<vmem>>, vector<8x512xf32>,
    return
  }
  func.func @transform_0(%arg0: i32, %arg1: i32) -> (i32, i32) {
    %c0_i32 = arith.constant 0 : i32
    %c0_i32_0 = arith.constant 0 : i32
    return %arg0, %c0_i32 : i32, i32
  }
  func.func @transform_1(%arg0: i32, %arg1: i32) -> (i32, i32) {
    %c0_i32 = arith.constant 0 : i32
    %c0_i32_0 = arith.constant 0 : i32
    return %c0_i32, %arg1 : i32, i32
  }
  func.func @transform_2(%arg0: i32, %arg1: i32) -> (i32, i32) {
    %c0_i32 = arith.constant 0 : i32
    %c0_i32_0 = arith.constant 0 : i32
    return %c0_i32, %arg1 : i32, i32
  }
  func.func @transform_3(%arg0: i32, %arg1: i32) -> (i32, i32) {
    %c0_i32 = arith.constant 0 : i32
    return %arg0, %arg1 : i32, i32
  }
}

</mosaic_0001>

<llo_original>
// kernel: linear_pallas.1
$region0: #{linear_pallas.1}
  #allocation0 [shape = 'u32[]', space=smem, size = 0x4, offset = 0x4, fixed_abs, tag = 'smem constant byte address 0x4 - core index']
  #allocation1 [shape = 'u32[144,128]{1,0:T(1,128)}', space=vmem, size = 0x12000, scoped, tag = 'internal scratch']
  %s0 = inlined_call_operand.vmem [shape: f32[8,1024], index: 0, kind: input, shape index: {}]
  %s1 = inlined_call_operand.hbm [shape: f32[1024,1024], index: 1, kind: input, shape index: {}]
  %s2 = inlined_call_operand.hbm [shape: f32[1,1024], index: 2, kind: input, shape index: {}]
  %s3 = inlined_call_operand.hbm [shape: f32[8,1024], index: 3, kind: output, shape index: {}]
  %s4 = sld [smem:[#allocation0]]
  $region53: #{linear_pallas.1} parent=0
    _
  %s6 = ssub.s32 1, %s4
  %s7 = scalar_select 0, %s6, %s4
  $region1: #{linear_pallas.1} parent=0
    #allocation2 [shape = 'u8[4194304]{0}', space=vmem, size = 0x400000, scoped, tag = 'input window, operand 1']
    #allocation3 [shape = 's32[2]{0}', space=sflag, size = 0x8, scoped, tag = 'scoped memory for linear_pallas.1']
    #allocation4 [shape = 's32[2]{0}', space=sflag, size = 0x8, scoped, tag = 'scoped memory for linear_pallas.1']
    #allocation5 [shape = 'u8[4096]{0}', space=vmem, size = 0x1000, scoped, tag = 'input window, operand 2']
    #allocation6 [shape = 's32[2]{0}', space=sflag, size = 0x8, scoped, tag = 'scoped memory for linear_pallas.1']
    #allocation7 [shape = 'u8[32768]{0}', space=vmem, size = 0x8000, scoped, tag = 'output window, operand 0']
    %8 = vsyncpa [#allocation3], 0
    %s9 = scalar_lea.sflag [#allocation3], 1
    %10 = vsyncpa %s9, 0
    %11 = vsyncpa [#allocation6], 0
    %s12 = scalar_lea.sflag [#allocation6], 1
    %13 = vsyncpa %s12, 0
    %14 = vsyncpa [#allocation4], 0
    %s15 = scalar_lea.sflag [#allocation4], 1
    %16 = vsyncpa %s15, 0
    loop: start=0, step=1, limit=4
    $region2: #{linear_pallas.1} parent=1 // loop_pre_header
      _
    $region3: #{linear_pallas.1} parent=1 // loop_header
      %s18 = sphi 0, %s22
      %p19 = scmp.ge.s32.totalorder %s18, 4
      %s25 = sphi 0, %s37
      %s26 = sphi 0, %s33
      %s27 = sphi 0, %s25
      %s28 = sphi 0, %s26
      %s29 = sphi 0, %s27
      %s30 = sphi 0, %s28
      %s40 = sphi 0, %s42
      %s43 = sphi 0, %s40
      %s44 = sphi 0, %s43
      %s60 = sphi 0, %s44
      %s66 = sphi 0, %s68
      %s69 = sphi 0, %s66
      %s70 = sphi 0, %s69
      %s86 = sphi 0, %s70
      %s92 = sphi 0, %s94
      %s95 = sphi 0, %s92
      %s96 = sphi 0, %s95
      %s112 = sphi 0, %s96
      %s120 = sphi 0, %s122
      %s123 = sphi 0, %s120
      %s124 = sphi 0, %s123
      %s140 = sphi 0, %s124
    $region4: #{linear_pallas.1} parent=1 // loop_header_branch
      %21 = sbr.rel (%p19) target = $region8
    $region5: #{linear_pallas.1} parent=1 // loop_body
      %s23 = ssub.s32 %s18, 1
      %s24 = ssub.s32 %s18, 2
      %s31 = sadd.s32 1, %s26
      %p32 = scmp.ge.s32.totalorder %s31, 2
      %s33 = scalar_select %p32, 0, %s31
      %s34 = sadd.s32 1, %s25
      %s35 = scalar_select %p32, %s34, %s25
      %p36 = scmp.ge.s32.totalorder %s35, 1
      %s37 = scalar_select %p36, 0, %s35
      %s38 = ssub.s32 %s25, %s37
      %p39 = scmp.eq.s32.totalorder %s38, 0
      %s41 = sadd.s32 %s40, 1
      %s42 = scalar_select %p39, %s40, %s41
      %p45 = pneg %p39
      %p46 = scmp.eq.s32.totalorder %s18, 1
      %p47 = por %p45, %p46
      %p48 = scmp.ne.s32.totalorder %s40, %s43
      %p49 = scmp.eq.s32.totalorder %s18, 0
      %p50 = por %p48, %p49
      %p51 = scmp.ne.s32.totalorder %s40, %s43
      %p52 = scmp.eq.s32.totalorder %s23, 1
      %p53 = por %p51, %p52
      %p54 = scmp.ne.s32.totalorder %s43, %s44
      %p55 = scmp.eq.s32.totalorder %s23, 0
      %p56 = por %p54, %p55
      %p57 = scmp.ne.s32.totalorder %s43, %s44
      %p58 = scmp.eq.s32.totalorder %s24, 1
      %p59 = por %p57, %p58
      %p61 = scmp.ne.s32.totalorder %s44, %s60
      %p62 = scmp.eq.s32.totalorder %s24, 0
      %p63 = por %p61, %p62
      %s64 = ssub.s32 %s26, %s33
      %p65 = scmp.eq.s32.totalorder %s64, 0
      %s67 = sadd.s32 %s66, 1
      %s68 = scalar_select %p65, %s66, %s67
      %p71 = pneg %p65
      %p72 = scmp.eq.s32.totalorder %s18, 1
      %p73 = por %p71, %p72
      %p74 = scmp.ne.s32.totalorder %s66, %s69
      %p75 = scmp.eq.s32.totalorder %s18, 0
      %p76 = por %p74, %p75
      %p77 = scmp.ne.s32.totalorder %s66, %s69
      %p78 = scmp.eq.s32.totalorder %s23, 1
      %p79 = por %p77, %p78
      %p80 = scmp.ne.s32.totalorder %s69, %s70
      %p81 = scmp.eq.s32.totalorder %s23, 0
      %p82 = por %p80, %p81
      %p83 = scmp.ne.s32.totalorder %s69, %s70
      %p84 = scmp.eq.s32.totalorder %s24, 1
      %p85 = por %p83, %p84
      %p87 = scmp.ne.s32.totalorder %s70, %s86
      %p88 = scmp.eq.s32.totalorder %s24, 0
      %p89 = por %p87, %p88
      %s90 = ssub.s32 %s26, %s33
      %p91 = scmp.eq.s32.totalorder %s90, 0
      %s93 = sadd.s32 %s92, 1
      %s94 = scalar_select %p91, %s92, %s93
      %p97 = pneg %p91
      %p98 = scmp.eq.s32.totalorder %s18, 1
      %p99 = por %p97, %p98
      %p100 = scmp.ne.s32.totalorder %s92, %s95
      %p101 = scmp.eq.s32.totalorder %s18, 0
      %p102 = por %p100, %p101
      %p103 = scmp.ne.s32.totalorder %s92, %s95
      %p104 = scmp.eq.s32.totalorder %s23, 1
      %p105 = por %p103, %p104
      %p106 = scmp.ne.s32.totalorder %s95, %s96
      %p107 = scmp.eq.s32.totalorder %s23, 0
      %p108 = por %p106, %p107
      %p109 = scmp.ne.s32.totalorder %s95, %s96
      %p110 = scmp.eq.s32.totalorder %s24, 1
      %p111 = por %p109, %p110
      %p113 = scmp.ne.s32.totalorder %s96, %s112
      %p114 = scmp.eq.s32.totalorder %s24, 0
      %p115 = por %p113, %p114
      %s116 = ssub.s32 %s25, %s37
      %s117 = ssub.s32 %s26, %s33
      %s118 = sor.u32 %s116, %s117
      %p119 = scmp.eq.s32.totalorder %s118, 0
      %s121 = sadd.s32 %s120, 1
      %s122 = scalar_select %p119, %s120, %s121
      %p125 = pneg %p119
      %p126 = scmp.eq.s32.totalorder %s18, 1
      %p127 = por %p125, %p126
      %p128 = scmp.ne.s32.totalorder %s120, %s123
      %p129 = scmp.eq.s32.totalorder %s18, 0
      %p130 = por %p128, %p129
      %p131 = scmp.ne.s32.totalorder %s120, %s123
      %p132 = scmp.eq.s32.totalorder %s23, 1
      %p133 = por %p131, %p132
      %p134 = scmp.ne.s32.totalorder %s123, %s124
      %p135 = scmp.eq.s32.totalorder %s23, 0
      %p136 = por %p134, %p135
      %p137 = scmp.ne.s32.totalorder %s123, %s124
      %p138 = scmp.eq.s32.totalorder %s24, 1
      %p139 = por %p137, %p138
      %p141 = scmp.ne.s32.totalorder %s124, %s140
      %p142 = scmp.eq.s32.totalorder %s24, 0
      %p143 = por %p141, %p142
      %p144 = scmp.le.s32.totalorder 1, %s18
      %p145 = scmp.lt.s32.totalorder %s18, 3
      %p146 = pnand %p144, %p145
      %p147 = pneg %p146
      // Predicated region
      $region9: #{linear_pallas.1} parent=5 // pred_check
        _
      $region10: #{linear_pallas.1} parent=5 // pred_check_branch
        %149 = sbr.rel (%p146) target = $region12
      $region11: #{linear_pallas.1} parent=5 // pred_region
        %s150 = ssub.s32 %s18, 1
        // Predicated region
        $region13: #{linear_pallas.1} parent=11 // pred_check
          %p151 = pneg %p56
        $region14: #{linear_pallas.1} parent=11 // pred_check_branch
          %153 = sbr.rel (%p151) target = $region16
        $region15: #{linear_pallas.1} parent=11 // pred_region
          %p154 = scmp.lt.s32.totalorder %s27, 0
          %s155 = scalar_select %p154, %s27, 0
          %s156 = smul.addr %s155, 8
          %s157 = smul.addr %s156, 8
          %s158 = scalar_lea.vmem %s0, %s157
        $region16: #{linear_pallas.1} parent=11 // pred_fallthru
          _
      $region12: #{linear_pallas.1} parent=5 // pred_fallthru
        _
      %p159 = scmp.lt.s32.totalorder %s18, 2
      // Predicated region
      $region17: #{linear_pallas.1} parent=5 // pred_check
        %p160 = pneg %p159
      $region18: #{linear_pallas.1} parent=5 // pred_check_branch
        %162 = sbr.rel (%p160) target = $region20
      $region19: #{linear_pallas.1} parent=5 // pred_region
        // Predicated region
        $region21: #{linear_pallas.1} parent=19 // pred_check
          %p163 = pneg %p76
        $region22: #{linear_pallas.1} parent=19 // pred_check_branch
          %165 = sbr.rel (%p163) target = $region24
        $region23: #{linear_pallas.1} parent=19 // pred_region
          %s166 = sand.u32 %s66, 1
          %s167 = scalar_lea.sflag [#allocation3], %s166
          %s168 = sand.u32 %s66, 1
          %s169 = smul.addr %s168, 4096
          %s170 = scalar_lea.vmem [#allocation2], %s169
          %s171 = smul.u32 4, %s26
          %s173 = ssub.s32 65536, 65536
          %174 = vsyncadd %s167, %s173
          %s175 = smul.addr %s171, 128
          %s176 = scalar_lea.hbm %s1, %s175
          %s177 = sshll.u32 %s170, 4
          %s178 = int_to_ptr.vmem [resolvable:$true] %s177
          %183 = dma.hbm_to_vmem [thread:$0]  %s176, 65536, %s178, %s167, 1024, 512, 32
        $region24: #{linear_pallas.1} parent=19 // pred_fallthru
          _
        // Predicated region
        $region25: #{linear_pallas.1} parent=19 // pred_check
          %p184 = pneg %p102
        $region26: #{linear_pallas.1} parent=19 // pred_check_branch
          %186 = sbr.rel (%p184) target = $region28
        $region27: #{linear_pallas.1} parent=19 // pred_region
          %s187 = sand.u32 %s92, 1
          %s188 = scalar_lea.sflag [#allocation6], %s187
          %s189 = sand.u32 %s92, 1
          %s190 = smul.addr %s189, 4
          %s191 = scalar_lea.vmem [#allocation5], %s190
          %s192 = smul.u32 4, %s26
          %s194 = ssub.s32 64, 64
          %195 = vsyncadd %s188, %s194
          %s196 = smul.addr %s192, 16
          %s197 = scalar_lea.hbm %s2, %s196
          %s199 = sshll.u32 %s191, 4
          %s200 = int_to_ptr.vmem [resolvable:$true] %s199
          %202 = dma.hbm_to_vmem [thread:$0]  %s197, 64, %s200, %s188
        $region28: #{linear_pallas.1} parent=19 // pred_fallthru
          _
      $region20: #{linear_pallas.1} parent=5 // pred_fallthru
        _
      %p203 = scmp.le.s32.totalorder 1, %s18
      %p204 = scmp.lt.s32.totalorder %s18, 3
      %p205 = pnand %p203, %p204
      %p206 = pneg %p205
      // Predicated region
      $region29: #{linear_pallas.1} parent=5 // pred_check
        _
      $region30: #{linear_pallas.1} parent=5 // pred_check_branch
        %208 = sbr.rel (%p205) target = $region32
      $region31: #{linear_pallas.1} parent=5 // pred_region
        %s209 = ssub.s32 %s18, 1
        %s210 = sand.u32 %s69, 1
        %s211 = scalar_lea.sflag [#allocation3], %s210
        %s212 = sand.u32 %s69, 1
        %s213 = smul.addr %s212, 4096
        %s214 = scalar_lea.vmem [#allocation2], %s213
        // Predicated region
        $region33: #{linear_pallas.1} parent=31 // pred_check
          %p215 = pneg %p82
        $region34: #{linear_pallas.1} parent=31 // pred_check_branch
          %217 = sbr.rel (%p215) target = $region36
        $region35: #{linear_pallas.1} parent=31 // pred_region
          %218 = dma.done %s211, 65536
        $region36: #{linear_pallas.1} parent=31 // pred_fallthru
          _
        %s219 = sand.u32 %s95, 1
        %s220 = scalar_lea.sflag [#allocation6], %s219
        %s221 = sand.u32 %s95, 1
        %s222 = smul.addr %s221, 4
        %s223 = scalar_lea.vmem [#allocation5], %s222
        // Predicated region
        $region37: #{linear_pallas.1} parent=31 // pred_check
          %p224 = pneg %p108
        $region38: #{linear_pallas.1} parent=31 // pred_check_branch
          %226 = sbr.rel (%p224) target = $region40
        $region39: #{linear_pallas.1} parent=31 // pred_region
          %227 = dma.done %s220, 64
        $region40: #{linear_pallas.1} parent=31 // pred_fallthru
          _
        %p228 = scmp.lt.s32.totalorder %s27, 0
        %s229 = scalar_select %p228, %s27, 0
        %s230 = smul.addr %s229, 8
        %s231 = smul.addr %s230, 8
        %s232 = scalar_lea.vmem %s0, %s231
        %p233 = pneg %p56
        %p234 = pneg %p53
        %s235 = sand.u32 %s69, 1
        %s236 = scalar_lea.sflag [#allocation3], %s235
        %s237 = sand.u32 %s69, 1
        %s238 = smul.addr %s237, 4096
        %s239 = scalar_lea.vmem [#allocation2], %s238
        %p240 = pneg %p82
        %p241 = pneg %p79
        %s242 = sand.u32 %s95, 1
        %s243 = scalar_lea.sflag [#allocation6], %s242
        %s244 = sand.u32 %s95, 1
        %s245 = smul.addr %s244, 4
        %s246 = scalar_lea.vmem [#allocation5], %s245
        %p247 = pneg %p108
        %p248 = pneg %p105
        %p249 = pneg %p136
        %p250 = pneg %p133
        %s251 = sand.u32 %s123, 1
        %s252 = scalar_lea.sflag [#allocation4], %s251
        %s253 = sand.u32 %s123, 1
        %s254 = smul.addr %s253, 32
        %s255 = scalar_lea.vmem [#allocation7], %s254
        %p256 = scmp.lt.s32.totalorder %s27, 0
        %s257 = scalar_select %p256, %s27, 0
        %s258 = smul.addr %s257, 8
        %s259 = smul.addr %s258, 8
        %s260 = scalar_lea.vmem %s0, %s259
        %s261 = smul.u32 4, %s28
        %s262 = smul.u32 4, %s28
        %s263 = smul.u32 4, %s28
        %v264 = vld [vmem:[%s260] sm:$0xff]
        %v265 = vld [vmem:[%s260 + $0x8] sm:$0xff]
        %v266 = vld [vmem:[%s260 + $0x10] sm:$0xff]
        %v267 = vld [vmem:[%s260 + $0x18] sm:$0xff]
        %v268 = vld [vmem:[%s260 + $0x20] sm:$0xff]
        %v269 = vld [vmem:[%s260 + $0x28] sm:$0xff]
        %v270 = vld [vmem:[%s260 + $0x30] sm:$0xff]
        %v271 = vld [vmem:[%s260 + $0x38] sm:$0xff]
        %v272 = vld [vmem:[%s214] sm:$0xff]
        %v273 = vld [vmem:[%s214 + $0x8] sm:$0xff]
        %v274 = vld [vmem:[%s214 + $0x10] sm:$0xff]
        %v275 = vld [vmem:[%s214 + $0x18] sm:$0xff]
        %v276 = vld [vmem:[%s214 + $0x20] sm:$0xff]
        %v277 = vld [vmem:[%s214 + $0x28] sm:$0xff]
        %v278 = vld [vmem:[%s214 + $0x30] sm:$0xff]
        %v279 = vld [vmem:[%s214 + $0x38] sm:$0xff]
        %v280 = vld [vmem:[%s214 + $0x40] sm:$0xff]
        %v281 = vld [vmem:[%s214 + $0x48] sm:$0xff]
        %v282 = vld [vmem:[%s214 + $0x50] sm:$0xff]
        %v283 = vld [vmem:[%s214 + $0x58] sm:$0xff]
        %v284 = vld [vmem:[%s214 + $0x60] sm:$0xff]
        %v285 = vld [vmem:[%s214 + $0x68] sm:$0xff]
        %v286 = vld [vmem:[%s214 + $0x70] sm:$0xff]
        %v287 = vld [vmem:[%s214 + $0x78] sm:$0xff]
        %v288 = vld [vmem:[%s214 + $0x80] sm:$0xff]
        %v289 = vld [vmem:[%s214 + $0x88] sm:$0xff]
        %v290 = vld [vmem:[%s214 + $0x90] sm:$0xff]
        %v291 = vld [vmem:[%s214 + $0x98] sm:$0xff]
        %v292 = vld [vmem:[%s214 + $0xa0] sm:$0xff]
        %v293 = vld [vmem:[%s214 + $0xa8] sm:$0xff]
        %v294 = vld [vmem:[%s214 + $0xb0] sm:$0xff]
        %v295 = vld [vmem:[%s214 + $0xb8] sm:$0xff]
        %v296 = vld [vmem:[%s214 + $0xc0] sm:$0xff]
        %v297 = vld [vmem:[%s214 + $0xc8] sm:$0xff]
        %v298 = vld [vmem:[%s214 + $0xd0] sm:$0xff]
        %v299 = vld [vmem:[%s214 + $0xd8] sm:$0xff]
        %v300 = vld [vmem:[%s214 + $0xe0] sm:$0xff]
        %v301 = vld [vmem:[%s214 + $0xe8] sm:$0xff]
        %v302 = vld [vmem:[%s214 + $0xf0] sm:$0xff]
        %v303 = vld [vmem:[%s214 + $0xf8] sm:$0xff]
        %v304 = vld [vmem:[%s214 + $0x100] sm:$0xff]
        %v305 = vld [vmem:[%s214 + $0x108] sm:$0xff]
        %v306 = vld [vmem:[%s214 + $0x110] sm:$0xff]
        %v307 = vld [vmem:[%s214 + $0x118] sm:$0xff]
        %v308 = vld [vmem:[%s214 + $0x120] sm:$0xff]
        %v309 = vld [vmem:[%s214 + $0x128] sm:$0xff]
        %v310 = vld [vmem:[%s214 + $0x130] sm:$0xff]
        %v311 = vld [vmem:[%s214 + $0x138] sm:$0xff]
        %v312 = vld [vmem:[%s214 + $0x140] sm:$0xff]
        %v313 = vld [vmem:[%s214 + $0x148] sm:$0xff]
        %v314 = vld [vmem:[%s214 + $0x150] sm:$0xff]
        %v315 = vld [vmem:[%s214 + $0x158] sm:$0xff]
        %v316 = vld [vmem:[%s214 + $0x160] sm:$0xff]
        %v317 = vld [vmem:[%s214 + $0x168] sm:$0xff]
        %v318 = vld [vmem:[%s214 + $0x170] sm:$0xff]
        %v319 = vld [vmem:[%s214 + $0x178] sm:$0xff]
        %v320 = vld [vmem:[%s214 + $0x180] sm:$0xff]
        %v321 = vld [vmem:[%s214 + $0x188] sm:$0xff]
        %v322 = vld [vmem:[%s214 + $0x190] sm:$0xff]
        %v323 = vld [vmem:[%s214 + $0x198] sm:$0xff]
        %v324 = vld [vmem:[%s214 + $0x1a0] sm:$0xff]
        %v325 = vld [vmem:[%s214 + $0x1a8] sm:$0xff]
        %v326 = vld [vmem:[%s214 + $0x1b0] sm:$0xff]
        %v327 = vld [vmem:[%s214 + $0x1b8] sm:$0xff]
        %v328 = vld [vmem:[%s214 + $0x1c0] sm:$0xff]
        %v329 = vld [vmem:[%s214 + $0x1c8] sm:$0xff]
        %v330 = vld [vmem:[%s214 + $0x1d0] sm:$0xff]
        %v331 = vld [vmem:[%s214 + $0x1d8] sm:$0xff]
        %v332 = vld [vmem:[%s214 + $0x1e0] sm:$0xff]
        %v333 = vld [vmem:[%s214 + $0x1e8] sm:$0xff]
        %v334 = vld [vmem:[%s214 + $0x1f0] sm:$0xff]
        %v335 = vld [vmem:[%s214 + $0x1f8] sm:$0xff]
        %v336 = vld [vmem:[%s214 + $0x200] sm:$0xff]
        %v337 = vld [vmem:[%s214 + $0x208] sm:$0xff]
        %v338 = vld [vmem:[%s214 + $0x210] sm:$0xff]
        %v339 = vld [vmem:[%s214 + $0x218] sm:$0xff]
        %v340 = vld [vmem:[%s214 + $0x220] sm:$0xff]
        %v341 = vld [vmem:[%s214 + $0x228] sm:$0xff]
        %v342 = vld [vmem:[%s214 + $0x230] sm:$0xff]
        %v343 = vld [vmem:[%s214 + $0x238] sm:$0xff]
        %v344 = vld [vmem:[%s214 + $0x240] sm:$0xff]
        %v345 = vld [vmem:[%s214 + $0x248] sm:$0xff]
        %v346 = vld [vmem:[%s214 + $0x250] sm:$0xff]
        %v347 = vld [vmem:[%s214 + $0x258] sm:$0xff]
        %v348 = vld [vmem:[%s214 + $0x260] sm:$0xff]
        %v349 = vld [vmem:[%s214 + $0x268] sm:$0xff]
        %v350 = vld [vmem:[%s214 + $0x270] sm:$0xff]
        %v351 = vld [vmem:[%s214 + $0x278] sm:$0xff]
        %v352 = vld [vmem:[%s214 + $0x280] sm:$0xff]
        %v353 = vld [vmem:[%s214 + $0x288] sm:$0xff]
        %v354 = vld [vmem:[%s214 + $0x290] sm:$0xff]
        %v355 = vld [vmem:[%s214 + $0x298] sm:$0xff]
        %v356 = vld [vmem:[%s214 + $0x2a0] sm:$0xff]
        %v357 = vld [vmem:[%s214 + $0x2a8] sm:$0xff]
        %v358 = vld [vmem:[%s214 + $0x2b0] sm:$0xff]
        %v359 = vld [vmem:[%s214 + $0x2b8] sm:$0xff]
        %v360 = vld [vmem:[%s214 + $0x2c0] sm:$0xff]
        %v361 = vld [vmem:[%s214 + $0x2c8] sm:$0xff]
        %v362 = vld [vmem:[%s214 + $0x2d0] sm:$0xff]
        %v363 = vld [vmem:[%s214 + $0x2d8] sm:$0xff]
        %v364 = vld [vmem:[%s214 + $0x2e0] sm:$0xff]
        %v365 = vld [vmem:[%s214 + $0x2e8] sm:$0xff]
        %v366 = vld [vmem:[%s214 + $0x2f0] sm:$0xff]
        %v367 = vld [vmem:[%s214 + $0x2f8] sm:$0xff]
        %v368 = vld [vmem:[%s214 + $0x300] sm:$0xff]
        %v369 = vld [vmem:[%s214 + $0x308] sm:$0xff]
        %v370 = vld [vmem:[%s214 + $0x310] sm:$0xff]
        %v371 = vld [vmem:[%s214 + $0x318] sm:$0xff]
        %v372 = vld [vmem:[%s214 + $0x320] sm:$0xff]
        %v373 = vld [vmem:[%s214 + $0x328] sm:$0xff]
        %v374 = vld [vmem:[%s214 + $0x330] sm:$0xff]
        %v375 = vld [vmem:[%s214 + $0x338] sm:$0xff]
        %v376 = vld [vmem:[%s214 + $0x340] sm:$0xff]
        %v377 = vld [vmem:[%s214 + $0x348] sm:$0xff]
        %v378 = vld [vmem:[%s214 + $0x350] sm:$0xff]
        %v379 = vld [vmem:[%s214 + $0x358] sm:$0xff]
        %v380 = vld [vmem:[%s214 + $0x360] sm:$0xff]
        %v381 = vld [vmem:[%s214 + $0x368] sm:$0xff]
        %v382 = vld [vmem:[%s214 + $0x370] sm:$0xff]
        %v383 = vld [vmem:[%s214 + $0x378] sm:$0xff]
        %v384 = vld [vmem:[%s214 + $0x380] sm:$0xff]
        %v385 = vld [vmem:[%s214 + $0x388] sm:$0xff]
        %v386 = vld [vmem:[%s214 + $0x390] sm:$0xff]
        %v387 = vld [vmem:[%s214 + $0x398] sm:$0xff]
        %v388 = vld [vmem:[%s214 + $0x3a0] sm:$0xff]
        %v389 = vld [vmem:[%s214 + $0x3a8] sm:$0xff]
        %v390 = vld [vmem:[%s214 + $0x3b0] sm:$0xff]
        %v391 = vld [vmem:[%s214 + $0x3b8] sm:$0xff]
        %v392 = vld [vmem:[%s214 + $0x3c0] sm:$0xff]
        %v393 = vld [vmem:[%s214 + $0x3c8] sm:$0xff]
        %v394 = vld [vmem:[%s214 + $0x3d0] sm:$0xff]
        %v395 = vld [vmem:[%s214 + $0x3d8] sm:$0xff]
        %v396 = vld [vmem:[%s214 + $0x3e0] sm:$0xff]
        %v397 = vld [vmem:[%s214 + $0x3e8] sm:$0xff]
        %v398 = vld [vmem:[%s214 + $0x3f0] sm:$0xff]
        %v399 = vld [vmem:[%s214 + $0x3f8] sm:$0xff]
        %v400 = vld [vmem:[%s214 + $0x400] sm:$0xff]
        %v401 = vld [vmem:[%s214 + $0x408] sm:$0xff]
        %v402 = vld [vmem:[%s214 + $0x410] sm:$0xff]
        %v403 = vld [vmem:[%s214 + $0x418] sm:$0xff]
        %v404 = vld [vmem:[%s214 + $0x420] sm:$0xff]
        %v405 = vld [vmem:[%s214 + $0x428] sm:$0xff]
        %v406 = vld [vmem:[%s214 + $0x430] sm:$0xff]
        %v407 = vld [vmem:[%s214 + $0x438] sm:$0xff]
        %v408 = vld [vmem:[%s214 + $0x440] sm:$0xff]
        %v409 = vld [vmem:[%s214 + $0x448] sm:$0xff]
        %v410 = vld [vmem:[%s214 + $0x450] sm:$0xff]
        %v411 = vld [vmem:[%s214 + $0x458] sm:$0xff]
        %v412 = vld [vmem:[%s214 + $0x460] sm:$0xff]
        %v413 = vld [vmem:[%s214 + $0x468] sm:$0xff]
        %v414 = vld [vmem:[%s214 + $0x470] sm:$0xff]
        %v415 = vld [vmem:[%s214 + $0x478] sm:$0xff]
        %v416 = vld [vmem:[%s214 + $0x480] sm:$0xff]
        %v417 = vld [vmem:[%s214 + $0x488] sm:$0xff]
        %v418 = vld [vmem:[%s214 + $0x490] sm:$0xff]
        %v419 = vld [vmem:[%s214 + $0x498] sm:$0xff]
        %v420 = vld [vmem:[%s214 + $0x4a0] sm:$0xff]
        %v421 = vld [vmem:[%s214 + $0x4a8] sm:$0xff]
        %v422 = vld [vmem:[%s214 + $0x4b0] sm:$0xff]
        %v423 = vld [vmem:[%s214 + $0x4b8] sm:$0xff]
        %v424 = vld [vmem:[%s214 + $0x4c0] sm:$0xff]
        %v425 = vld [vmem:[%s214 + $0x4c8] sm:$0xff]
        %v426 = vld [vmem:[%s214 + $0x4d0] sm:$0xff]
        %v427 = vld [vmem:[%s214 + $0x4d8] sm:$0xff]
        %v428 = vld [vmem:[%s214 + $0x4e0] sm:$0xff]
        %v429 = vld [vmem:[%s214 + $0x4e8] sm:$0xff]
        %v430 = vld [vmem:[%s214 + $0x4f0] sm:$0xff]
        %v431 = vld [vmem:[%s214 + $0x4f8] sm:$0xff]
        %v432 = vld [vmem:[%s214 + $0x500] sm:$0xff]
        %v433 = vld [vmem:[%s214 + $0x508] sm:$0xff]
        %v434 = vld [vmem:[%s214 + $0x510] sm:$0xff]
        %v435 = vld [vmem:[%s214 + $0x518] sm:$0xff]
        %v436 = vld [vmem:[%s214 + $0x520] sm:$0xff]
        %v437 = vld [vmem:[%s214 + $0x528] sm:$0xff]
        %v438 = vld [vmem:[%s214 + $0x530] sm:$0xff]
        %v439 = vld [vmem:[%s214 + $0x538] sm:$0xff]
        %v440 = vld [vmem:[%s214 + $0x540] sm:$0xff]
        %v441 = vld [vmem:[%s214 + $0x548] sm:$0xff]
        %v442 = vld [vmem:[%s214 + $0x550] sm:$0xff]
        %v443 = vld [vmem:[%s214 + $0x558] sm:$0xff]
        %v444 = vld [vmem:[%s214 + $0x560] sm:$0xff]
        %v445 = vld [vmem:[%s214 + $0x568] sm:$0xff]
        %v446 = vld [vmem:[%s214 + $0x570] sm:$0xff]
        %v447 = vld [vmem:[%s214 + $0x578] sm:$0xff]
        %v448 = vld [vmem:[%s214 + $0x580] sm:$0xff]
        %v449 = vld [vmem:[%s214 + $0x588] sm:$0xff]
        %v450 = vld [vmem:[%s214 + $0x590] sm:$0xff]
        %v451 = vld [vmem:[%s214 + $0x598] sm:$0xff]
        %v452 = vld [vmem:[%s214 + $0x5a0] sm:$0xff]
        %v453 = vld [vmem:[%s214 + $0x5a8] sm:$0xff]
        %v454 = vld [vmem:[%s214 + $0x5b0] sm:$0xff]
        %v455 = vld [vmem:[%s214 + $0x5b8] sm:$0xff]
        %v456 = vld [vmem:[%s214 + $0x5c0] sm:$0xff]
        %v457 = vld [vmem:[%s214 + $0x5c8] sm:$0xff]
        %v458 = vld [vmem:[%s214 + $0x5d0] sm:$0xff]
        %v459 = vld [vmem:[%s214 + $0x5d8] sm:$0xff]
        %v460 = vld [vmem:[%s214 + $0x5e0] sm:$0xff]
        %v461 = vld [vmem:[%s214 + $0x5e8] sm:$0xff]
        %v462 = vld [vmem:[%s214 + $0x5f0] sm:$0xff]
        %v463 = vld [vmem:[%s214 + $0x5f8] sm:$0xff]
        %v464 = vld [vmem:[%s214 + $0x600] sm:$0xff]
        %v465 = vld [vmem:[%s214 + $0x608] sm:$0xff]
        %v466 = vld [vmem:[%s214 + $0x610] sm:$0xff]
        %v467 = vld [vmem:[%s214 + $0x618] sm:$0xff]
        %v468 = vld [vmem:[%s214 + $0x620] sm:$0xff]
        %v469 = vld [vmem:[%s214 + $0x628] sm:$0xff]
        %v470 = vld [vmem:[%s214 + $0x630] sm:$0xff]
        %v471 = vld [vmem:[%s214 + $0x638] sm:$0xff]
        %v472 = vld [vmem:[%s214 + $0x640] sm:$0xff]
        %v473 = vld [vmem:[%s214 + $0x648] sm:$0xff]
        %v474 = vld [vmem:[%s214 + $0x650] sm:$0xff]
        %v475 = vld [vmem:[%s214 + $0x658] sm:$0xff]
        %v476 = vld [vmem:[%s214 + $0x660] sm:$0xff]
        %v477 = vld [vmem:[%s214 + $0x668] sm:$0xff]
        %v478 = vld [vmem:[%s214 + $0x670] sm:$0xff]
        %v479 = vld [vmem:[%s214 + $0x678] sm:$0xff]
        %v480 = vld [vmem:[%s214 + $0x680] sm:$0xff]
        %v481 = vld [vmem:[%s214 + $0x688] sm:$0xff]
        %v482 = vld [vmem:[%s214 + $0x690] sm:$0xff]
        %v483 = vld [vmem:[%s214 + $0x698] sm:$0xff]
        %v484 = vld [vmem:[%s214 + $0x6a0] sm:$0xff]
        %v485 = vld [vmem:[%s214 + $0x6a8] sm:$0xff]
        %v486 = vld [vmem:[%s214 + $0x6b0] sm:$0xff]
        %v487 = vld [vmem:[%s214 + $0x6b8] sm:$0xff]
        %v488 = vld [vmem:[%s214 + $0x6c0] sm:$0xff]
        %v489 = vld [vmem:[%s214 + $0x6c8] sm:$0xff]
        %v490 = vld [vmem:[%s214 + $0x6d0] sm:$0xff]
        %v491 = vld [vmem:[%s214 + $0x6d8] sm:$0xff]
        %v492 = vld [vmem:[%s214 + $0x6e0] sm:$0xff]
        %v493 = vld [vmem:[%s214 + $0x6e8] sm:$0xff]
        %v494 = vld [vmem:[%s214 + $0x6f0] sm:$0xff]
        %v495 = vld [vmem:[%s214 + $0x6f8] sm:$0xff]
        %v496 = vld [vmem:[%s214 + $0x700] sm:$0xff]
        %v497 = vld [vmem:[%s214 + $0x708] sm:$0xff]
        %v498 = vld [vmem:[%s214 + $0x710] sm:$0xff]
        %v499 = vld [vmem:[%s214 + $0x718] sm:$0xff]
        %v500 = vld [vmem:[%s214 + $0x720] sm:$0xff]
        %v501 = vld [vmem:[%s214 + $0x728] sm:$0xff]
        %v502 = vld [vmem:[%s214 + $0x730] sm:$0xff]
        %v503 = vld [vmem:[%s214 + $0x738] sm:$0xff]
        %v504 = vld [vmem:[%s214 + $0x740] sm:$0xff]
        %v505 = vld [vmem:[%s214 + $0x748] sm:$0xff]
        %v506 = vld [vmem:[%s214 + $0x750] sm:$0xff]
        %v507 = vld [vmem:[%s214 + $0x758] sm:$0xff]
        %v508 = vld [vmem:[%s214 + $0x760] sm:$0xff]
        %v509 = vld [vmem:[%s214 + $0x768] sm:$0xff]
        %v510 = vld [vmem:[%s214 + $0x770] sm:$0xff]
        %v511 = vld [vmem:[%s214 + $0x778] sm:$0xff]
        %v512 = vld [vmem:[%s214 + $0x780] sm:$0xff]
        %v513 = vld [vmem:[%s214 + $0x788] sm:$0xff]
        %v514 = vld [vmem:[%s214 + $0x790] sm:$0xff]
        %v515 = vld [vmem:[%s214 + $0x798] sm:$0xff]
        %v516 = vld [vmem:[%s214 + $0x7a0] sm:$0xff]
        %v517 = vld [vmem:[%s214 + $0x7a8] sm:$0xff]
        %v518 = vld [vmem:[%s214 + $0x7b0] sm:$0xff]
        %v519 = vld [vmem:[%s214 + $0x7b8] sm:$0xff]
        %v520 = vld [vmem:[%s214 + $0x7c0] sm:$0xff]
        %v521 = vld [vmem:[%s214 + $0x7c8] sm:$0xff]
        %v522 = vld [vmem:[%s214 + $0x7d0] sm:$0xff]
        %v523 = vld [vmem:[%s214 + $0x7d8] sm:$0xff]
        %v524 = vld [vmem:[%s214 + $0x7e0] sm:$0xff]
        %v525 = vld [vmem:[%s214 + $0x7e8] sm:$0xff]
        %v526 = vld [vmem:[%s214 + $0x7f0] sm:$0xff]
        %v527 = vld [vmem:[%s214 + $0x7f8] sm:$0xff]
        %v528 = vld [vmem:[%s214 + $0x800] sm:$0xff]
        %v529 = vld [vmem:[%s214 + $0x808] sm:$0xff]
        %v530 = vld [vmem:[%s214 + $0x810] sm:$0xff]
        %v531 = vld [vmem:[%s214 + $0x818] sm:$0xff]
        %v532 = vld [vmem:[%s214 + $0x820] sm:$0xff]
        %v533 = vld [vmem:[%s214 + $0x828] sm:$0xff]
        %v534 = vld [vmem:[%s214 + $0x830] sm:$0xff]
        %v535 = vld [vmem:[%s214 + $0x838] sm:$0xff]
        %v536 = vld [vmem:[%s214 + $0x840] sm:$0xff]
        %v537 = vld [vmem:[%s214 + $0x848] sm:$0xff]
        %v538 = vld [vmem:[%s214 + $0x850] sm:$0xff]
        %v539 = vld [vmem:[%s214 + $0x858] sm:$0xff]
        %v540 = vld [vmem:[%s214 + $0x860] sm:$0xff]
        %v541 = vld [vmem:[%s214 + $0x868] sm:$0xff]
        %v542 = vld [vmem:[%s214 + $0x870] sm:$0xff]
        %v543 = vld [vmem:[%s214 + $0x878] sm:$0xff]
        %v544 = vld [vmem:[%s214 + $0x880] sm:$0xff]
        %v545 = vld [vmem:[%s214 + $0x888] sm:$0xff]
        %v546 = vld [vmem:[%s214 + $0x890] sm:$0xff]
        %v547 = vld [vmem:[%s214 + $0x898] sm:$0xff]
        %v548 = vld [vmem:[%s214 + $0x8a0] sm:$0xff]
        %v549 = vld [vmem:[%s214 + $0x8a8] sm:$0xff]
        %v550 = vld [vmem:[%s214 + $0x8b0] sm:$0xff]
        %v551 = vld [vmem:[%s214 + $0x8b8] sm:$0xff]
        %v552 = vld [vmem:[%s214 + $0x8c0] sm:$0xff]
        %v553 = vld [vmem:[%s214 + $0x8c8] sm:$0xff]
        %v554 = vld [vmem:[%s214 + $0x8d0] sm:$0xff]
        %v555 = vld [vmem:[%s214 + $0x8d8] sm:$0xff]
        %v556 = vld [vmem:[%s214 + $0x8e0] sm:$0xff]
        %v557 = vld [vmem:[%s214 + $0x8e8] sm:$0xff]
        %v558 = vld [vmem:[%s214 + $0x8f0] sm:$0xff]
        %v559 = vld [vmem:[%s214 + $0x8f8] sm:$0xff]
        %v560 = vld [vmem:[%s214 + $0x900] sm:$0xff]
        %v561 = vld [vmem:[%s214 + $0x908] sm:$0xff]
        %v562 = vld [vmem:[%s214 + $0x910] sm:$0xff]
        %v563 = vld [vmem:[%s214 + $0x918] sm:$0xff]
        %v564 = vld [vmem:[%s214 + $0x920] sm:$0xff]
        %v565 = vld [vmem:[%s214 + $0x928] sm:$0xff]
        %v566 = vld [vmem:[%s214 + $0x930] sm:$0xff]
        %v567 = vld [vmem:[%s214 + $0x938] sm:$0xff]
        %v568 = vld [vmem:[%s214 + $0x940] sm:$0xff]
        %v569 = vld [vmem:[%s214 + $0x948] sm:$0xff]
        %v570 = vld [vmem:[%s214 + $0x950] sm:$0xff]
        %v571 = vld [vmem:[%s214 + $0x958] sm:$0xff]
        %v572 = vld [vmem:[%s214 + $0x960] sm:$0xff]
        %v573 = vld [vmem:[%s214 + $0x968] sm:$0xff]
        %v574 = vld [vmem:[%s214 + $0x970] sm:$0xff]
        %v575 = vld [vmem:[%s214 + $0x978] sm:$0xff]
        %v576 = vld [vmem:[%s214 + $0x980] sm:$0xff]
        %v577 = vld [vmem:[%s214 + $0x988] sm:$0xff]
        %v578 = vld [vmem:[%s214 + $0x990] sm:$0xff]
        %v579 = vld [vmem:[%s214 + $0x998] sm:$0xff]
        %v580 = vld [vmem:[%s214 + $0x9a0] sm:$0xff]
        %v581 = vld [vmem:[%s214 + $0x9a8] sm:$0xff]
        %v582 = vld [vmem:[%s214 + $0x9b0] sm:$0xff]
        %v583 = vld [vmem:[%s214 + $0x9b8] sm:$0xff]
        %v584 = vld [vmem:[%s214 + $0x9c0] sm:$0xff]
        %v585 = vld [vmem:[%s214 + $0x9c8] sm:$0xff]
        %v586 = vld [vmem:[%s214 + $0x9d0] sm:$0xff]
        %v587 = vld [vmem:[%s214 + $0x9d8] sm:$0xff]
        %v588 = vld [vmem:[%s214 + $0x9e0] sm:$0xff]
        %v589 = vld [vmem:[%s214 + $0x9e8] sm:$0xff]
        %v590 = vld [vmem:[%s214 + $0x9f0] sm:$0xff]
        %v591 = vld [vmem:[%s214 + $0x9f8] sm:$0xff]
        %v592 = vld [vmem:[%s214 + $0xa00] sm:$0xff]
        %v593 = vld [vmem:[%s214 + $0xa08] sm:$0xff]
        %v594 = vld [vmem:[%s214 + $0xa10] sm:$0xff]
        %v595 = vld [vmem:[%s214 + $0xa18] sm:$0xff]
        %v596 = vld [vmem:[%s214 + $0xa20] sm:$0xff]
        %v597 = vld [vmem:[%s214 + $0xa28] sm:$0xff]
        %v598 = vld [vmem:[%s214 + $0xa30] sm:$0xff]
        %v599 = vld [vmem:[%s214 + $0xa38] sm:$0xff]
        %v600 = vld [vmem:[%s214 + $0xa40] sm:$0xff]
        %v601 = vld [vmem:[%s214 + $0xa48] sm:$0xff]
        %v602 = vld [vmem:[%s214 + $0xa50] sm:$0xff]
        %v603 = vld [vmem:[%s214 + $0xa58] sm:$0xff]
        %v604 = vld [vmem:[%s214 + $0xa60] sm:$0xff]
        %v605 = vld [vmem:[%s214 + $0xa68] sm:$0xff]
        %v606 = vld [vmem:[%s214 + $0xa70] sm:$0xff]
        %v607 = vld [vmem:[%s214 + $0xa78] sm:$0xff]
        %v608 = vld [vmem:[%s214 + $0xa80] sm:$0xff]
        %v609 = vld [vmem:[%s214 + $0xa88] sm:$0xff]
        %v610 = vld [vmem:[%s214 + $0xa90] sm:$0xff]
        %v611 = vld [vmem:[%s214 + $0xa98] sm:$0xff]
        %v612 = vld [vmem:[%s214 + $0xaa0] sm:$0xff]
        %v613 = vld [vmem:[%s214 + $0xaa8] sm:$0xff]
        %v614 = vld [vmem:[%s214 + $0xab0] sm:$0xff]
        %v615 = vld [vmem:[%s214 + $0xab8] sm:$0xff]
        %v616 = vld [vmem:[%s214 + $0xac0] sm:$0xff]
        %v617 = vld [vmem:[%s214 + $0xac8] sm:$0xff]
        %v618 = vld [vmem:[%s214 + $0xad0] sm:$0xff]
        %v619 = vld [vmem:[%s214 + $0xad8] sm:$0xff]
        %v620 = vld [vmem:[%s214 + $0xae0] sm:$0xff]
        %v621 = vld [vmem:[%s214 + $0xae8] sm:$0xff]
        %v622 = vld [vmem:[%s214 + $0xaf0] sm:$0xff]
        %v623 = vld [vmem:[%s214 + $0xaf8] sm:$0xff]
        %v624 = vld [vmem:[%s214 + $0xb00] sm:$0xff]
        %v625 = vld [vmem:[%s214 + $0xb08] sm:$0xff]
        %v626 = vld [vmem:[%s214 + $0xb10] sm:$0xff]
        %v627 = vld [vmem:[%s214 + $0xb18] sm:$0xff]
        %v628 = vld [vmem:[%s214 + $0xb20] sm:$0xff]
        %v629 = vld [vmem:[%s214 + $0xb28] sm:$0xff]
        %v630 = vld [vmem:[%s214 + $0xb30] sm:$0xff]
        %v631 = vld [vmem:[%s214 + $0xb38] sm:$0xff]
        %v632 = vld [vmem:[%s214 + $0xb40] sm:$0xff]
        %v633 = vld [vmem:[%s214 + $0xb48] sm:$0xff]
        %v634 = vld [vmem:[%s214 + $0xb50] sm:$0xff]
        %v635 = vld [vmem:[%s214 + $0xb58] sm:$0xff]
        %v636 = vld [vmem:[%s214 + $0xb60] sm:$0xff]
        %v637 = vld [vmem:[%s214 + $0xb68] sm:$0xff]
        %v638 = vld [vmem:[%s214 + $0xb70] sm:$0xff]
        %v639 = vld [vmem:[%s214 + $0xb78] sm:$0xff]
        %v640 = vld [vmem:[%s214 + $0xb80] sm:$0xff]
        %v641 = vld [vmem:[%s214 + $0xb88] sm:$0xff]
        %v642 = vld [vmem:[%s214 + $0xb90] sm:$0xff]
        %v643 = vld [vmem:[%s214 + $0xb98] sm:$0xff]
        %v644 = vld [vmem:[%s214 + $0xba0] sm:$0xff]
        %v645 = vld [vmem:[%s214 + $0xba8] sm:$0xff]
        %v646 = vld [vmem:[%s214 + $0xbb0] sm:$0xff]
        %v647 = vld [vmem:[%s214 + $0xbb8] sm:$0xff]
        %v648 = vld [vmem:[%s214 + $0xbc0] sm:$0xff]
        %v649 = vld [vmem:[%s214 + $0xbc8] sm:$0xff]
        %v650 = vld [vmem:[%s214 + $0xbd0] sm:$0xff]
        %v651 = vld [vmem:[%s214 + $0xbd8] sm:$0xff]
        %v652 = vld [vmem:[%s214 + $0xbe0] sm:$0xff]
        %v653 = vld [vmem:[%s214 + $0xbe8] sm:$0xff]
        %v654 = vld [vmem:[%s214 + $0xbf0] sm:$0xff]
        %v655 = vld [vmem:[%s214 + $0xbf8] sm:$0xff]
        %v656 = vld [vmem:[%s214 + $0xc00] sm:$0xff]
        %v657 = vld [vmem:[%s214 + $0xc08] sm:$0xff]
        %v658 = vld [vmem:[%s214 + $0xc10] sm:$0xff]
        %v659 = vld [vmem:[%s214 + $0xc18] sm:$0xff]
        %v660 = vld [vmem:[%s214 + $0xc20] sm:$0xff]
        %v661 = vld [vmem:[%s214 + $0xc28] sm:$0xff]
        %v662 = vld [vmem:[%s214 + $0xc30] sm:$0xff]
        %v663 = vld [vmem:[%s214 + $0xc38] sm:$0xff]
        %v664 = vld [vmem:[%s214 + $0xc40] sm:$0xff]
        %v665 = vld [vmem:[%s214 + $0xc48] sm:$0xff]
        %v666 = vld [vmem:[%s214 + $0xc50] sm:$0xff]
        %v667 = vld [vmem:[%s214 + $0xc58] sm:$0xff]
        %v668 = vld [vmem:[%s214 + $0xc60] sm:$0xff]
        %v669 = vld [vmem:[%s214 + $0xc68] sm:$0xff]
        %v670 = vld [vmem:[%s214 + $0xc70] sm:$0xff]
        %v671 = vld [vmem:[%s214 + $0xc78] sm:$0xff]
        %v672 = vld [vmem:[%s214 + $0xc80] sm:$0xff]
        %v673 = vld [vmem:[%s214 + $0xc88] sm:$0xff]
        %v674 = vld [vmem:[%s214 + $0xc90] sm:$0xff]
        %v675 = vld [vmem:[%s214 + $0xc98] sm:$0xff]
        %v676 = vld [vmem:[%s214 + $0xca0] sm:$0xff]
        %v677 = vld [vmem:[%s214 + $0xca8] sm:$0xff]
        %v678 = vld [vmem:[%s214 + $0xcb0] sm:$0xff]
        %v679 = vld [vmem:[%s214 + $0xcb8] sm:$0xff]
        %v680 = vld [vmem:[%s214 + $0xcc0] sm:$0xff]
        %v681 = vld [vmem:[%s214 + $0xcc8] sm:$0xff]
        %v682 = vld [vmem:[%s214 + $0xcd0] sm:$0xff]
        %v683 = vld [vmem:[%s214 + $0xcd8] sm:$0xff]
        %v684 = vld [vmem:[%s214 + $0xce0] sm:$0xff]
        %v685 = vld [vmem:[%s214 + $0xce8] sm:$0xff]
        %v686 = vld [vmem:[%s214 + $0xcf0] sm:$0xff]
        %v687 = vld [vmem:[%s214 + $0xcf8] sm:$0xff]
        %v688 = vld [vmem:[%s214 + $0xd00] sm:$0xff]
        %v689 = vld [vmem:[%s214 + $0xd08] sm:$0xff]
        %v690 = vld [vmem:[%s214 + $0xd10] sm:$0xff]
        %v691 = vld [vmem:[%s214 + $0xd18] sm:$0xff]
        %v692 = vld [vmem:[%s214 + $0xd20] sm:$0xff]
        %v693 = vld [vmem:[%s214 + $0xd28] sm:$0xff]
        %v694 = vld [vmem:[%s214 + $0xd30] sm:$0xff]
        %v695 = vld [vmem:[%s214 + $0xd38] sm:$0xff]
        %v696 = vld [vmem:[%s214 + $0xd40] sm:$0xff]
        %v697 = vld [vmem:[%s214 + $0xd48] sm:$0xff]
        %v698 = vld [vmem:[%s214 + $0xd50] sm:$0xff]
        %v699 = vld [vmem:[%s214 + $0xd58] sm:$0xff]
        %v700 = vld [vmem:[%s214 + $0xd60] sm:$0xff]
        %v701 = vld [vmem:[%s214 + $0xd68] sm:$0xff]
        %v702 = vld [vmem:[%s214 + $0xd70] sm:$0xff]
        %v703 = vld [vmem:[%s214 + $0xd78] sm:$0xff]
        %v704 = vld [vmem:[%s214 + $0xd80] sm:$0xff]
        %v705 = vld [vmem:[%s214 + $0xd88] sm:$0xff]
        %v706 = vld [vmem:[%s214 + $0xd90] sm:$0xff]
        %v707 = vld [vmem:[%s214 + $0xd98] sm:$0xff]
        %v708 = vld [vmem:[%s214 + $0xda0] sm:$0xff]
        %v709 = vld [vmem:[%s214 + $0xda8] sm:$0xff]
        %v710 = vld [vmem:[%s214 + $0xdb0] sm:$0xff]
        %v711 = vld [vmem:[%s214 + $0xdb8] sm:$0xff]
        %v712 = vld [vmem:[%s214 + $0xdc0] sm:$0xff]
        %v713 = vld [vmem:[%s214 + $0xdc8] sm:$0xff]
        %v714 = vld [vmem:[%s214 + $0xdd0] sm:$0xff]
        %v715 = vld [vmem:[%s214 + $0xdd8] sm:$0xff]
        %v716 = vld [vmem:[%s214 + $0xde0] sm:$0xff]
        %v717 = vld [vmem:[%s214 + $0xde8] sm:$0xff]
        %v718 = vld [vmem:[%s214 + $0xdf0] sm:$0xff]
        %v719 = vld [vmem:[%s214 + $0xdf8] sm:$0xff]
        %v720 = vld [vmem:[%s214 + $0xe00] sm:$0xff]
        %v721 = vld [vmem:[%s214 + $0xe08] sm:$0xff]
        %v722 = vld [vmem:[%s214 + $0xe10] sm:$0xff]
        %v723 = vld [vmem:[%s214 + $0xe18] sm:$0xff]
        %v724 = vld [vmem:[%s214 + $0xe20] sm:$0xff]
        %v725 = vld [vmem:[%s214 + $0xe28] sm:$0xff]
        %v726 = vld [vmem:[%s214 + $0xe30] sm:$0xff]
        %v727 = vld [vmem:[%s214 + $0xe38] sm:$0xff]
        %v728 = vld [vmem:[%s214 + $0xe40] sm:$0xff]
        %v729 = vld [vmem:[%s214 + $0xe48] sm:$0xff]
        %v730 = vld [vmem:[%s214 + $0xe50] sm:$0xff]
        %v731 = vld [vmem:[%s214 + $0xe58] sm:$0xff]
        %v732 = vld [vmem:[%s214 + $0xe60] sm:$0xff]
        %v733 = vld [vmem:[%s214 + $0xe68] sm:$0xff]
        %v734 = vld [vmem:[%s214 + $0xe70] sm:$0xff]
        %v735 = vld [vmem:[%s214 + $0xe78] sm:$0xff]
        %v736 = vld [vmem:[%s214 + $0xe80] sm:$0xff]
        %v737 = vld [vmem:[%s214 + $0xe88] sm:$0xff]
        %v738 = vld [vmem:[%s214 + $0xe90] sm:$0xff]
        %v739 = vld [vmem:[%s214 + $0xe98] sm:$0xff]
        %v740 = vld [vmem:[%s214 + $0xea0] sm:$0xff]
        %v741 = vld [vmem:[%s214 + $0xea8] sm:$0xff]
        %v742 = vld [vmem:[%s214 + $0xeb0] sm:$0xff]
        %v743 = vld [vmem:[%s214 + $0xeb8] sm:$0xff]
        %v744 = vld [vmem:[%s214 + $0xec0] sm:$0xff]
        %v745 = vld [vmem:[%s214 + $0xec8] sm:$0xff]
        %v746 = vld [vmem:[%s214 + $0xed0] sm:$0xff]
        %v747 = vld [vmem:[%s214 + $0xed8] sm:$0xff]
        %v748 = vld [vmem:[%s214 + $0xee0] sm:$0xff]
        %v749 = vld [vmem:[%s214 + $0xee8] sm:$0xff]
        %v750 = vld [vmem:[%s214 + $0xef0] sm:$0xff]
        %v751 = vld [vmem:[%s214 + $0xef8] sm:$0xff]
        %v752 = vld [vmem:[%s214 + $0xf00] sm:$0xff]
        %v753 = vld [vmem:[%s214 + $0xf08] sm:$0xff]
        %v754 = vld [vmem:[%s214 + $0xf10] sm:$0xff]
        %v755 = vld [vmem:[%s214 + $0xf18] sm:$0xff]
        %v756 = vld [vmem:[%s214 + $0xf20] sm:$0xff]
        %v757 = vld [vmem:[%s214 + $0xf28] sm:$0xff]
        %v758 = vld [vmem:[%s214 + $0xf30] sm:$0xff]
        %v759 = vld [vmem:[%s214 + $0xf38] sm:$0xff]
        %v760 = vld [vmem:[%s214 + $0xf40] sm:$0xff]
        %v761 = vld [vmem:[%s214 + $0xf48] sm:$0xff]
        %v762 = vld [vmem:[%s214 + $0xf50] sm:$0xff]
        %v763 = vld [vmem:[%s214 + $0xf58] sm:$0xff]
        %v764 = vld [vmem:[%s214 + $0xf60] sm:$0xff]
        %v765 = vld [vmem:[%s214 + $0xf68] sm:$0xff]
        %v766 = vld [vmem:[%s214 + $0xf70] sm:$0xff]
        %v767 = vld [vmem:[%s214 + $0xf78] sm:$0xff]
        %v768 = vld [vmem:[%s214 + $0xf80] sm:$0xff]
        %v769 = vld [vmem:[%s214 + $0xf88] sm:$0xff]
        %v770 = vld [vmem:[%s214 + $0xf90] sm:$0xff]
        %v771 = vld [vmem:[%s214 + $0xf98] sm:$0xff]
        %v772 = vld [vmem:[%s214 + $0xfa0] sm:$0xff]
        %v773 = vld [vmem:[%s214 + $0xfa8] sm:$0xff]
        %v774 = vld [vmem:[%s214 + $0xfb0] sm:$0xff]
        %v775 = vld [vmem:[%s214 + $0xfb8] sm:$0xff]
        %v776 = vld [vmem:[%s214 + $0xfc0] sm:$0xff]
        %v777 = vld [vmem:[%s214 + $0xfc8] sm:$0xff]
        %v778 = vld [vmem:[%s214 + $0xfd0] sm:$0xff]
        %v779 = vld [vmem:[%s214 + $0xfd8] sm:$0xff]
        %v780 = vld [vmem:[%s214 + $0xfe0] sm:$0xff]
        %v781 = vld [vmem:[%s214 + $0xfe8] sm:$0xff]
        %v782 = vld [vmem:[%s214 + $0xff0] sm:$0xff]
        %v783 = vld [vmem:[%s214 + $0xff8] sm:$0xff]
        %v784 = vld [vmem:[%s223] sm:$0xf]
        %v786 = vlaneseq
        %v787 = vshrl.u32 %v786, 7
        %v788 = vsub.s32 0, %v787
        %v789 = vrot.slane %v784, %v788
        %v790 = vlaneseq
        %v791 = vshrl.u32 %v790, 7
        %v792 = vsub.s32 1, %v791
        %v793 = vrot.slane %v784, %v792
        %v794 = vlaneseq
        %v795 = vshrl.u32 %v794, 7
        %v796 = vsub.s32 2, %v795
        %v797 = vrot.slane %v784, %v796
        %v798 = vlaneseq
        %v799 = vshrl.u32 %v798, 7
        %v800 = vsub.s32 3, %v799
        %v801 = vrot.slane %v784, %v800
        %806 = vmatprep.subr.mxu0 %v273
        %807 = vmatpush1.msra.mxu0 %v272
        %808 = vmatprep.subr.mxu0 %v277
        %809 = vmatpush1.msra.mxu0 %v276
        %810 = vmatprep.subr.mxu0 %v281
        %811 = vmatpush1.msra.mxu0 %v280
        %812 = vmatprep.subr.mxu0 %v285
        %813 = vmatpush1.msra.mxu0 %v284
        %814 = vmatprep.subr.mxu0 %v289
        %815 = vmatpush1.msra.mxu0 %v288
        %816 = vmatprep.subr.mxu0 %v293
        %817 = vmatpush1.msra.mxu0 %v292
        %818 = vmatprep.subr.mxu0 %v297
        %819 = vmatpush1.msra.mxu0 %v296
        %820 = vmatprep.subr.mxu0 %v301
        %821 = vmatpush1.msra.mxu0 %v300
        %822 = vmatprep.subr.mxu0 %v305
        %823 = vmatpush1.msra.mxu0 %v304
        %824 = vmatprep.subr.mxu0 %v309
        %825 = vmatpush1.msra.mxu0 %v308
        %826 = vmatprep.subr.mxu0 %v313
        %827 = vmatpush1.msra.mxu0 %v312
        %828 = vmatprep.subr.mxu0 %v317
        %829 = vmatpush1.msra.mxu0 %v316
        %830 = vmatprep.subr.mxu0 %v321
        %831 = vmatpush1.msra.mxu0 %v320
        %832 = vmatprep.subr.mxu0 %v325
        %833 = vmatpush1.msra.mxu0 %v324
        %834 = vmatprep.subr.mxu0 %v329
        %835 = vmatpush1.msra.mxu0 %v328
        %836 = vmatprep.subr.mxu0 %v333
        %837 = vmatpush1.msra.mxu0 %v332
        %838 = vmatprep.subr.mxu0 %v337
        %839 = vmatpush1.msra.mxu0 %v336
        %840 = vmatprep.subr.mxu0 %v341
        %841 = vmatpush1.msra.mxu0 %v340
        %842 = vmatprep.subr.mxu0 %v345
        %843 = vmatpush1.msra.mxu0 %v344
        %844 = vmatprep.subr.mxu0 %v349
        %845 = vmatpush1.msra.mxu0 %v348
        %846 = vmatprep.subr.mxu0 %v353
        %847 = vmatpush1.msra.mxu0 %v352
        %848 = vmatprep.subr.mxu0 %v357
        %849 = vmatpush1.msra.mxu0 %v356
        %850 = vmatprep.subr.mxu0 %v361
        %851 = vmatpush1.msra.mxu0 %v360
        %852 = vmatprep.subr.mxu0 %v365
        %853 = vmatpush1.msra.mxu0 %v364
        %854 = vmatprep.subr.mxu0 %v369
        %855 = vmatpush1.msra.mxu0 %v368
        %856 = vmatprep.subr.mxu0 %v373
        %857 = vmatpush1.msra.mxu0 %v372
        %858 = vmatprep.subr.mxu0 %v377
        %859 = vmatpush1.msra.mxu0 %v376
        %860 = vmatprep.subr.mxu0 %v381
        %861 = vmatpush1.msra.mxu0 %v380
        %862 = vmatprep.subr.mxu0 %v385
        %863 = vmatpush1.msra.mxu0 %v384
        %864 = vmatprep.subr.mxu0 %v389
        %865 = vmatpush1.msra.mxu0 %v388
        %866 = vmatprep.subr.mxu0 %v393
        %867 = vmatpush1.msra.mxu0 %v392
        %868 = vmatprep.subr.mxu0 %v397
        %869 = vmatpush1.msra.mxu0 %v396
        %870 = vmatprep.mubr.f32.mxu0 %v265
        %871 = vmatmul.mubr.f32.gmra.mrb[0].mxu0 %v264
        %v872 = vpop.f32.mrb[0].mxu0
        %v873 = vadd.f32 %v789, %v872
        %v874 = vpop.f32.mrb[0].mxu0
        %v875 = vadd.f32 %v793, %v874
        %876 = vdwg.mxu0
        %877 = vmatprep.subr.mxu0 %v401
        %878 = vmatpush1.msra.mxu0 %v400
        %879 = vmatprep.subr.mxu0 %v405
        %880 = vmatpush1.msra.mxu0 %v404
        %881 = vmatprep.subr.mxu0 %v409
        %882 = vmatpush1.msra.mxu0 %v408
        %883 = vmatprep.subr.mxu0 %v413
        %884 = vmatpush1.msra.mxu0 %v412
        %885 = vmatprep.subr.mxu0 %v417
        %886 = vmatpush1.msra.mxu0 %v416
        %887 = vmatprep.subr.mxu0 %v421
        %888 = vmatpush1.msra.mxu0 %v420
        %889 = vmatprep.subr.mxu0 %v425
        %890 = vmatpush1.msra.mxu0 %v424
        %891 = vmatprep.subr.mxu0 %v429
        %892 = vmatpush1.msra.mxu0 %v428
        %893 = vmatprep.subr.mxu0 %v433
        %894 = vmatpush1.msra.mxu0 %v432
        %895 = vmatprep.subr.mxu0 %v437
        %896 = vmatpush1.msra.mxu0 %v436
        %897 = vmatprep.subr.mxu0 %v441
        %898 = vmatpush1.msra.mxu0 %v440
        %899 = vmatprep.subr.mxu0 %v445
        %900 = vmatpush1.msra.mxu0 %v444
        %901 = vmatprep.subr.mxu0 %v449
        %902 = vmatpush1.msra.mxu0 %v448
        %903 = vmatprep.subr.mxu0 %v453
        %904 = vmatpush1.msra.mxu0 %v452
        %905 = vmatprep.subr.mxu0 %v457
        %906 = vmatpush1.msra.mxu0 %v456
        %907 = vmatprep.subr.mxu0 %v461
        %908 = vmatpush1.msra.mxu0 %v460
        %909 = vmatprep.subr.mxu0 %v465
        %910 = vmatpush1.msra.mxu0 %v464
        %911 = vmatprep.subr.mxu0 %v469
        %912 = vmatpush1.msra.mxu0 %v468
        %913 = vmatprep.subr.mxu0 %v473
        %914 = vmatpush1.msra.mxu0 %v472
        %915 = vmatprep.subr.mxu0 %v477
        %916 = vmatpush1.msra.mxu0 %v476
        %917 = vmatprep.subr.mxu0 %v481
        %918 = vmatpush1.msra.mxu0 %v480
        %919 = vmatprep.subr.mxu0 %v485
        %920 = vmatpush1.msra.mxu0 %v484
        %921 = vmatprep.subr.mxu0 %v489
        %922 = vmatpush1.msra.mxu0 %v488
        %923 = vmatprep.subr.mxu0 %v493
        %924 = vmatpush1.msra.mxu0 %v492
        %925 = vmatprep.subr.mxu0 %v497
        %926 = vmatpush1.msra.mxu0 %v496
        %927 = vmatprep.subr.mxu0 %v501
        %928 = vmatpush1.msra.mxu0 %v500
        %929 = vmatprep.subr.mxu0 %v505
        %930 = vmatpush1.msra.mxu0 %v504
        %931 = vmatprep.subr.mxu0 %v509
        %932 = vmatpush1.msra.mxu0 %v508
        %933 = vmatprep.subr.mxu0 %v513
        %934 = vmatpush1.msra.mxu0 %v512
        %935 = vmatprep.subr.mxu0 %v517
        %936 = vmatpush1.msra.mxu0 %v516
        %937 = vmatprep.subr.mxu0 %v521
        %938 = vmatpush1.msra.mxu0 %v520
        %939 = vmatprep.subr.mxu0 %v525
        %940 = vmatpush1.msra.mxu0 %v524
        %941 = vmatprep.mubr.f32.mxu0 %v267
        %942 = vmatmul.mubr.f32.gmra.mrb[0].mxu0 %v266
        %v943 = vpop.f32.mrb[0].mxu0
        %v944 = vadd.f32 %v873, %v943
        %v945 = vpop.f32.mrb[0].mxu0
        %v946 = vadd.f32 %v875, %v945
        %947 = vdwg.mxu0
        %948 = vmatprep.subr.mxu0 %v529
        %949 = vmatpush1.msra.mxu0 %v528
        %950 = vmatprep.subr.mxu0 %v533
        %951 = vmatpush1.msra.mxu0 %v532
        %952 = vmatprep.subr.mxu0 %v537
        %953 = vmatpush1.msra.mxu0 %v536
        %954 = vmatprep.subr.mxu0 %v541
        %955 = vmatpush1.msra.mxu0 %v540
        %956 = vmatprep.subr.mxu0 %v545
        %957 = vmatpush1.msra.mxu0 %v544
        %958 = vmatprep.subr.mxu0 %v549
        %959 = vmatpush1.msra.mxu0 %v548
        %960 = vmatprep.subr.mxu0 %v553
        %961 = vmatpush1.msra.mxu0 %v552
        %962 = vmatprep.subr.mxu0 %v557
        %963 = vmatpush1.msra.mxu0 %v556
        %964 = vmatprep.subr.mxu0 %v561
        %965 = vmatpush1.msra.mxu0 %v560
        %966 = vmatprep.subr.mxu0 %v565
        %967 = vmatpush1.msra.mxu0 %v564
        %968 = vmatprep.subr.mxu0 %v569
        %969 = vmatpush1.msra.mxu0 %v568
        %970 = vmatprep.subr.mxu0 %v573
        %971 = vmatpush1.msra.mxu0 %v572
        %972 = vmatprep.subr.mxu0 %v577
        %973 = vmatpush1.msra.mxu0 %v576
        %974 = vmatprep.subr.mxu0 %v581
        %975 = vmatpush1.msra.mxu0 %v580
        %976 = vmatprep.subr.mxu0 %v585
        %977 = vmatpush1.msra.mxu0 %v584
        %978 = vmatprep.subr.mxu0 %v589
        %979 = vmatpush1.msra.mxu0 %v588
        %980 = vmatprep.subr.mxu0 %v593
        %981 = vmatpush1.msra.mxu0 %v592
        %982 = vmatprep.subr.mxu0 %v597
        %983 = vmatpush1.msra.mxu0 %v596
        %984 = vmatprep.subr.mxu0 %v601
        %985 = vmatpush1.msra.mxu0 %v600
        %986 = vmatprep.subr.mxu0 %v605
        %987 = vmatpush1.msra.mxu0 %v604
        %988 = vmatprep.subr.mxu0 %v609
        %989 = vmatpush1.msra.mxu0 %v608
        %990 = vmatprep.subr.mxu0 %v613
        %991 = vmatpush1.msra.mxu0 %v612
        %992 = vmatprep.subr.mxu0 %v617
        %993 = vmatpush1.msra.mxu0 %v616
        %994 = vmatprep.subr.mxu0 %v621
        %995 = vmatpush1.msra.mxu0 %v620
        %996 = vmatprep.subr.mxu0 %v625
        %997 = vmatpush1.msra.mxu0 %v624
        %998 = vmatprep.subr.mxu0 %v629
        %999 = vmatpush1.msra.mxu0 %v628
        %1000 = vmatprep.subr.mxu0 %v633
        %1001 = vmatpush1.msra.mxu0 %v632
        %1002 = vmatprep.subr.mxu0 %v637
        %1003 = vmatpush1.msra.mxu0 %v636
        %1004 = vmatprep.subr.mxu0 %v641
        %1005 = vmatpush1.msra.mxu0 %v640
        %1006 = vmatprep.subr.mxu0 %v645
        %1007 = vmatpush1.msra.mxu0 %v644
        %1008 = vmatprep.subr.mxu0 %v649
        %1009 = vmatpush1.msra.mxu0 %v648
        %1010 = vmatprep.subr.mxu0 %v653
        %1011 = vmatpush1.msra.mxu0 %v652
        %1012 = vmatprep.mubr.f32.mxu0 %v269
        %1013 = vmatmul.mubr.f32.gmra.mrb[0].mxu0 %v268
        %v1014 = vpop.f32.mrb[0].mxu0
        %v1015 = vadd.f32 %v944, %v1014
        %v1016 = vpop.f32.mrb[0].mxu0
        %v1017 = vadd.f32 %v946, %v1016
        %1018 = vdwg.mxu0
        %1019 = vmatprep.subr.mxu0 %v657
        %1020 = vmatpush1.msra.mxu0 %v656
        %1021 = vmatprep.subr.mxu0 %v661
        %1022 = vmatpush1.msra.mxu0 %v660
        %1023 = vmatprep.subr.mxu0 %v665
        %1024 = vmatpush1.msra.mxu0 %v664
        %1025 = vmatprep.subr.mxu0 %v669
        %1026 = vmatpush1.msra.mxu0 %v668
        %1027 = vmatprep.subr.mxu0 %v673
        %1028 = vmatpush1.msra.mxu0 %v672
        %1029 = vmatprep.subr.mxu0 %v677
        %1030 = vmatpush1.msra.mxu0 %v676
        %1031 = vmatprep.subr.mxu0 %v681
        %1032 = vmatpush1.msra.mxu0 %v680
        %1033 = vmatprep.subr.mxu0 %v685
        %1034 = vmatpush1.msra.mxu0 %v684
        %1035 = vmatprep.subr.mxu0 %v689
        %1036 = vmatpush1.msra.mxu0 %v688
        %1037 = vmatprep.subr.mxu0 %v693
        %1038 = vmatpush1.msra.mxu0 %v692
        %1039 = vmatprep.subr.mxu0 %v697
        %1040 = vmatpush1.msra.mxu0 %v696
        %1041 = vmatprep.subr.mxu0 %v701
        %1042 = vmatpush1.msra.mxu0 %v700
        %1043 = vmatprep.subr.mxu0 %v705
        %1044 = vmatpush1.msra.mxu0 %v704
        %1045 = vmatprep.subr.mxu0 %v709
        %1046 = vmatpush1.msra.mxu0 %v708
        %1047 = vmatprep.subr.mxu0 %v713
        %1048 = vmatpush1.msra.mxu0 %v712
        %1049 = vmatprep.subr.mxu0 %v717
        %1050 = vmatpush1.msra.mxu0 %v716
        %1051 = vmatprep.subr.mxu0 %v721
        %1052 = vmatpush1.msra.mxu0 %v720
        %1053 = vmatprep.subr.mxu0 %v725
        %1054 = vmatpush1.msra.mxu0 %v724
        %1055 = vmatprep.subr.mxu0 %v729
        %1056 = vmatpush1.msra.mxu0 %v728
        %1057 = vmatprep.subr.mxu0 %v733
        %1058 = vmatpush1.msra.mxu0 %v732
        %1059 = vmatprep.subr.mxu0 %v737
        %1060 = vmatpush1.msra.mxu0 %v736
        %1061 = vmatprep.subr.mxu0 %v741
        %1062 = vmatpush1.msra.mxu0 %v740
        %1063 = vmatprep.subr.mxu0 %v745
        %1064 = vmatpush1.msra.mxu0 %v744
        %1065 = vmatprep.subr.mxu0 %v749
        %1066 = vmatpush1.msra.mxu0 %v748
        %1067 = vmatprep.subr.mxu0 %v753
        %1068 = vmatpush1.msra.mxu0 %v752
        %1069 = vmatprep.subr.mxu0 %v757
        %1070 = vmatpush1.msra.mxu0 %v756
        %1071 = vmatprep.subr.mxu0 %v761
        %1072 = vmatpush1.msra.mxu0 %v760
        %1073 = vmatprep.subr.mxu0 %v765
        %1074 = vmatpush1.msra.mxu0 %v764
        %1075 = vmatprep.subr.mxu0 %v769
        %1076 = vmatpush1.msra.mxu0 %v768
        %1077 = vmatprep.subr.mxu0 %v773
        %1078 = vmatpush1.msra.mxu0 %v772
        %1079 = vmatprep.subr.mxu0 %v777
        %1080 = vmatpush1.msra.mxu0 %v776
        %1081 = vmatprep.subr.mxu0 %v781
        %1082 = vmatpush1.msra.mxu0 %v780
        %1083 = vmatprep.mubr.f32.mxu0 %v271
        %1084 = vmatmul.mubr.f32.gmra.mrb[0].mxu0 %v270
        %v1085 = vpop.f32.mrb[0].mxu0
        %v1086 = vadd.f32 %v1015, %v1085
        %v1087 = vpop.f32.mrb[0].mxu0
        %v1088 = vadd.f32 %v1017, %v1087
        %1089 = vdwg.mxu0
        %1090 = vmatprep.subr.mxu0 %v275
        %1091 = vmatpush1.msra.mxu0 %v274
        %1092 = vmatprep.subr.mxu0 %v279
        %1093 = vmatpush1.msra.mxu0 %v278
        %1094 = vmatprep.subr.mxu0 %v283
        %1095 = vmatpush1.msra.mxu0 %v282
        %1096 = vmatprep.subr.mxu0 %v287
        %1097 = vmatpush1.msra.mxu0 %v286
        %1098 = vmatprep.subr.mxu0 %v291
        %1099 = vmatpush1.msra.mxu0 %v290
        %1100 = vmatprep.subr.mxu0 %v295
        %1101 = vmatpush1.msra.mxu0 %v294
        %1102 = vmatprep.subr.mxu0 %v299
        %1103 = vmatpush1.msra.mxu0 %v298
        %1104 = vmatprep.subr.mxu0 %v303
        %1105 = vmatpush1.msra.mxu0 %v302
        %1106 = vmatprep.subr.mxu0 %v307
        %1107 = vmatpush1.msra.mxu0 %v306
        %1108 = vmatprep.subr.mxu0 %v311
        %1109 = vmatpush1.msra.mxu0 %v310
        %1110 = vmatprep.subr.mxu0 %v315
        %1111 = vmatpush1.msra.mxu0 %v314
        %1112 = vmatprep.subr.mxu0 %v319
        %1113 = vmatpush1.msra.mxu0 %v318
        %1114 = vmatprep.subr.mxu0 %v323
        %1115 = vmatpush1.msra.mxu0 %v322
        %1116 = vmatprep.subr.mxu0 %v327
        %1117 = vmatpush1.msra.mxu0 %v326
        %1118 = vmatprep.subr.mxu0 %v331
        %1119 = vmatpush1.msra.mxu0 %v330
        %1120 = vmatprep.subr.mxu0 %v335
        %1121 = vmatpush1.msra.mxu0 %v334
        %1122 = vmatprep.subr.mxu0 %v339
        %1123 = vmatpush1.msra.mxu0 %v338
        %1124 = vmatprep.subr.mxu0 %v343
        %1125 = vmatpush1.msra.mxu0 %v342
        %1126 = vmatprep.subr.mxu0 %v347
        %1127 = vmatpush1.msra.mxu0 %v346
        %1128 = vmatprep.subr.mxu0 %v351
        %1129 = vmatpush1.msra.mxu0 %v350
        %1130 = vmatprep.subr.mxu0 %v355
        %1131 = vmatpush1.msra.mxu0 %v354
        %1132 = vmatprep.subr.mxu0 %v359
        %1133 = vmatpush1.msra.mxu0 %v358
        %1134 = vmatprep.subr.mxu0 %v363
        %1135 = vmatpush1.msra.mxu0 %v362
        %1136 = vmatprep.subr.mxu0 %v367
        %1137 = vmatpush1.msra.mxu0 %v366
        %1138 = vmatprep.subr.mxu0 %v371
        %1139 = vmatpush1.msra.mxu0 %v370
        %1140 = vmatprep.subr.mxu0 %v375
        %1141 = vmatpush1.msra.mxu0 %v374
        %1142 = vmatprep.subr.mxu0 %v379
        %1143 = vmatpush1.msra.mxu0 %v378
        %1144 = vmatprep.subr.mxu0 %v383
        %1145 = vmatpush1.msra.mxu0 %v382
        %1146 = vmatprep.subr.mxu0 %v387
        %1147 = vmatpush1.msra.mxu0 %v386
        %1148 = vmatprep.subr.mxu0 %v391
        %1149 = vmatpush1.msra.mxu0 %v390
        %1150 = vmatprep.subr.mxu0 %v395
        %1151 = vmatpush1.msra.mxu0 %v394
        %1152 = vmatprep.subr.mxu0 %v399
        %1153 = vmatpush1.msra.mxu0 %v398
        %1154 = vmatprep.mubr.f32.mxu0 %v265
        %1155 = vmatmul.mubr.f32.gmra.mrb[0].mxu0 %v264
        %v1156 = vpop.f32.mrb[0].mxu0
        %v1157 = vadd.f32 %v797, %v1156
        %v1158 = vpop.f32.mrb[0].mxu0
        %v1159 = vadd.f32 %v801, %v1158
        %1160 = vdwg.mxu0
        %1161 = vmatprep.subr.mxu0 %v403
        %1162 = vmatpush1.msra.mxu0 %v402
        %1163 = vmatprep.subr.mxu0 %v407
        %1164 = vmatpush1.msra.mxu0 %v406
        %1165 = vmatprep.subr.mxu0 %v411
        %1166 = vmatpush1.msra.mxu0 %v410
        %1167 = vmatprep.subr.mxu0 %v415
        %1168 = vmatpush1.msra.mxu0 %v414
        %1169 = vmatprep.subr.mxu0 %v419
        %1170 = vmatpush1.msra.mxu0 %v418
        %1171 = vmatprep.subr.mxu0 %v423
        %1172 = vmatpush1.msra.mxu0 %v422
        %1173 = vmatprep.subr.mxu0 %v427
        %1174 = vmatpush1.msra.mxu0 %v426
        %1175 = vmatprep.subr.mxu0 %v431
        %1176 = vmatpush1.msra.mxu0 %v430
        %1177 = vmatprep.subr.mxu0 %v435
        %1178 = vmatpush1.msra.mxu0 %v434
        %1179 = vmatprep.subr.mxu0 %v439
        %1180 = vmatpush1.msra.mxu0 %v438
        %1181 = vmatprep.subr.mxu0 %v443
        %1182 = vmatpush1.msra.mxu0 %v442
        %1183 = vmatprep.subr.mxu0 %v447
        %1184 = vmatpush1.msra.mxu0 %v446
        %1185 = vmatprep.subr.mxu0 %v451
        %1186 = vmatpush1.msra.mxu0 %v450
        %1187 = vmatprep.subr.mxu0 %v455
        %1188 = vmatpush1.msra.mxu0 %v454
        %1189 = vmatprep.subr.mxu0 %v459
        %1190 = vmatpush1.msra.mxu0 %v458
        %1191 = vmatprep.subr.mxu0 %v463
        %1192 = vmatpush1.msra.mxu0 %v462
        %1193 = vmatprep.subr.mxu0 %v467
        %1194 = vmatpush1.msra.mxu0 %v466
        %1195 = vmatprep.subr.mxu0 %v471
        %1196 = vmatpush1.msra.mxu0 %v470
        %1197 = vmatprep.subr.mxu0 %v475
        %1198 = vmatpush1.msra.mxu0 %v474
        %1199 = vmatprep.subr.mxu0 %v479
        %1200 = vmatpush1.msra.mxu0 %v478
        %1201 = vmatprep.subr.mxu0 %v483
        %1202 = vmatpush1.msra.mxu0 %v482
        %1203 = vmatprep.subr.mxu0 %v487
        %1204 = vmatpush1.msra.mxu0 %v486
        %1205 = vmatprep.subr.mxu0 %v491
        %1206 = vmatpush1.msra.mxu0 %v490
        %1207 = vmatprep.subr.mxu0 %v495
        %1208 = vmatpush1.msra.mxu0 %v494
        %1209 = vmatprep.subr.mxu0 %v499
        %1210 = vmatpush1.msra.mxu0 %v498
        %1211 = vmatprep.subr.mxu0 %v503
        %1212 = vmatpush1.msra.mxu0 %v502
        %1213 = vmatprep.subr.mxu0 %v507
        %1214 = vmatpush1.msra.mxu0 %v506
        %1215 = vmatprep.subr.mxu0 %v511
        %1216 = vmatpush1.msra.mxu0 %v510
        %1217 = vmatprep.subr.mxu0 %v515
        %1218 = vmatpush1.msra.mxu0 %v514
        %1219 = vmatprep.subr.mxu0 %v519
        %1220 = vmatpush1.msra.mxu0 %v518
        %1221 = vmatprep.subr.mxu0 %v523
        %1222 = vmatpush1.msra.mxu0 %v522
        %1223 = vmatprep.subr.mxu0 %v527
        %1224 = vmatpush1.msra.mxu0 %v526
        %1225 = vmatprep.mubr.f32.mxu0 %v267
        %1226 = vmatmul.mubr.f32.gmra.mrb[0].mxu0 %v266
        %v1227 = vpop.f32.mrb[0].mxu0
        %v1228 = vadd.f32 %v1157, %v1227
        %v1229 = vpop.f32.mrb[0].mxu0
        %v1230 = vadd.f32 %v1159, %v1229
        %1231 = vdwg.mxu0
        %1232 = vmatprep.subr.mxu0 %v531
        %1233 = vmatpush1.msra.mxu0 %v530
        %1234 = vmatprep.subr.mxu0 %v535
        %1235 = vmatpush1.msra.mxu0 %v534
        %1236 = vmatprep.subr.mxu0 %v539
        %1237 = vmatpush1.msra.mxu0 %v538
        %1238 = vmatprep.subr.mxu0 %v543
        %1239 = vmatpush1.msra.mxu0 %v542
        %1240 = vmatprep.subr.mxu0 %v547
        %1241 = vmatpush1.msra.mxu0 %v546
        %1242 = vmatprep.subr.mxu0 %v551
        %1243 = vmatpush1.msra.mxu0 %v550
        %1244 = vmatprep.subr.mxu0 %v555
        %1245 = vmatpush1.msra.mxu0 %v554
        %1246 = vmatprep.subr.mxu0 %v559
        %1247 = vmatpush1.msra.mxu0 %v558
        %1248 = vmatprep.subr.mxu0 %v563
        %1249 = vmatpush1.msra.mxu0 %v562
        %1250 = vmatprep.subr.mxu0 %v567
        %1251 = vmatpush1.msra.mxu0 %v566
        %1252 = vmatprep.subr.mxu0 %v571
        %1253 = vmatpush1.msra.mxu0 %v570
        %1254 = vmatprep.subr.mxu0 %v575
        %1255 = vmatpush1.msra.mxu0 %v574
        %1256 = vmatprep.subr.mxu0 %v579
        %1257 = vmatpush1.msra.mxu0 %v578
        %1258 = vmatprep.subr.mxu0 %v583
        %1259 = vmatpush1.msra.mxu0 %v582
        %1260 = vmatprep.subr.mxu0 %v587
        %1261 = vmatpush1.msra.mxu0 %v586
        %1262 = vmatprep.subr.mxu0 %v591
        %1263 = vmatpush1.msra.mxu0 %v590
        %1264 = vmatprep.subr.mxu0 %v595
        %1265 = vmatpush1.msra.mxu0 %v594
        %1266 = vmatprep.subr.mxu0 %v599
        %1267 = vmatpush1.msra.mxu0 %v598
        %1268 = vmatprep.subr.mxu0 %v603
        %1269 = vmatpush1.msra.mxu0 %v602
        %1270 = vmatprep.subr.mxu0 %v607
        %1271 = vmatpush1.msra.mxu0 %v606
        %1272 = vmatprep.subr.mxu0 %v611
        %1273 = vmatpush1.msra.mxu0 %v610
        %1274 = vmatprep.subr.mxu0 %v615
        %1275 = vmatpush1.msra.mxu0 %v614
        %1276 = vmatprep.subr.mxu0 %v619
        %1277 = vmatpush1.msra.mxu0 %v618
        %1278 = vmatprep.subr.mxu0 %v623
        %1279 = vmatpush1.msra.mxu0 %v622
        %1280 = vmatprep.subr.mxu0 %v627
        %1281 = vmatpush1.msra.mxu0 %v626
        %1282 = vmatprep.subr.mxu0 %v631
        %1283 = vmatpush1.msra.mxu0 %v630
        %1284 = vmatprep.subr.mxu0 %v635
        %1285 = vmatpush1.msra.mxu0 %v634
        %1286 = vmatprep.subr.mxu0 %v639
        %1287 = vmatpush1.msra.mxu0 %v638
        %1288 = vmatprep.subr.mxu0 %v643
        %1289 = vmatpush1.msra.mxu0 %v642
        %1290 = vmatprep.subr.mxu0 %v647
        %1291 = vmatpush1.msra.mxu0 %v646
        %1292 = vmatprep.subr.mxu0 %v651
        %1293 = vmatpush1.msra.mxu0 %v650
        %1294 = vmatprep.subr.mxu0 %v655
        %1295 = vmatpush1.msra.mxu0 %v654
        %1296 = vmatprep.mubr.f32.mxu0 %v269
        %1297 = vmatmul.mubr.f32.gmra.mrb[0].mxu0 %v268
        %v1298 = vpop.f32.mrb[0].mxu0
        %v1299 = vadd.f32 %v1228, %v1298
        %v1300 = vpop.f32.mrb[0].mxu0
        %v1301 = vadd.f32 %v1230, %v1300
        %1302 = vdwg.mxu0
        %1303 = vmatprep.subr.mxu0 %v659
        %1304 = vmatpush1.msra.mxu0 %v658
        %1305 = vmatprep.subr.mxu0 %v663
        %1306 = vmatpush1.msra.mxu0 %v662
        %1307 = vmatprep.subr.mxu0 %v667
        %1308 = vmatpush1.msra.mxu0 %v666
        %1309 = vmatprep.subr.mxu0 %v671
        %1310 = vmatpush1.msra.mxu0 %v670
        %1311 = vmatprep.subr.mxu0 %v675
        %1312 = vmatpush1.msra.mxu0 %v674
        %1313 = vmatprep.subr.mxu0 %v679
        %1314 = vmatpush1.msra.mxu0 %v678
        %1315 = vmatprep.subr.mxu0 %v683
        %1316 = vmatpush1.msra.mxu0 %v682
        %1317 = vmatprep.subr.mxu0 %v687
        %1318 = vmatpush1.msra.mxu0 %v686
        %1319 = vmatprep.subr.mxu0 %v691
        %1320 = vmatpush1.msra.mxu0 %v690
        %1321 = vmatprep.subr.mxu0 %v695
        %1322 = vmatpush1.msra.mxu0 %v694
        %1323 = vmatprep.subr.mxu0 %v699
        %1324 = vmatpush1.msra.mxu0 %v698
        %1325 = vmatprep.subr.mxu0 %v703
        %1326 = vmatpush1.msra.mxu0 %v702
        %1327 = vmatprep.subr.mxu0 %v707
        %1328 = vmatpush1.msra.mxu0 %v706
        %1329 = vmatprep.subr.mxu0 %v711
        %1330 = vmatpush1.msra.mxu0 %v710
        %1331 = vmatprep.subr.mxu0 %v715
        %1332 = vmatpush1.msra.mxu0 %v714
        %1333 = vmatprep.subr.mxu0 %v719
        %1334 = vmatpush1.msra.mxu0 %v718
        %1335 = vmatprep.subr.mxu0 %v723
        %1336 = vmatpush1.msra.mxu0 %v722
        %1337 = vmatprep.subr.mxu0 %v727
        %1338 = vmatpush1.msra.mxu0 %v726
        %1339 = vmatprep.subr.mxu0 %v731
        %1340 = vmatpush1.msra.mxu0 %v730
        %1341 = vmatprep.subr.mxu0 %v735
        %1342 = vmatpush1.msra.mxu0 %v734
        %1343 = vmatprep.subr.mxu0 %v739
        %1344 = vmatpush1.msra.mxu0 %v738
        %1345 = vmatprep.subr.mxu0 %v743
        %1346 = vmatpush1.msra.mxu0 %v742
        %1347 = vmatprep.subr.mxu0 %v747
        %1348 = vmatpush1.msra.mxu0 %v746
        %1349 = vmatprep.subr.mxu0 %v751
        %1350 = vmatpush1.msra.mxu0 %v750
        %1351 = vmatprep.subr.mxu0 %v755
        %1352 = vmatpush1.msra.mxu0 %v754
        %1353 = vmatprep.subr.mxu0 %v759
        %1354 = vmatpush1.msra.mxu0 %v758
        %1355 = vmatprep.subr.mxu0 %v763
        %1356 = vmatpush1.msra.mxu0 %v762
        %1357 = vmatprep.subr.mxu0 %v767
        %1358 = vmatpush1.msra.mxu0 %v766
        %1359 = vmatprep.subr.mxu0 %v771
        %1360 = vmatpush1.msra.mxu0 %v770
        %1361 = vmatprep.subr.mxu0 %v775
        %1362 = vmatpush1.msra.mxu0 %v774
        %1363 = vmatprep.subr.mxu0 %v779
        %1364 = vmatpush1.msra.mxu0 %v778
        %1365 = vmatprep.subr.mxu0 %v783
        %1366 = vmatpush1.msra.mxu0 %v782
        %1367 = vmatprep.mubr.f32.mxu0 %v271
        %1368 = vmatmul.mubr.f32.gmra.mrb[0].mxu0 %v270
        %v1369 = vpop.f32.mrb[0].mxu0
        %v1370 = vadd.f32 %v1299, %v1369
        %v1371 = vpop.f32.mrb[0].mxu0
        %v1372 = vadd.f32 %v1301, %v1371
        %1373 = vdwg.mxu0
        %1374 = vst [vmem:[%s255] sm:$0xff] %v1086
        %1375 = vst [vmem:[%s255 + $0x8] sm:$0xff] %v1088
        %1376 = vst [vmem:[%s255 + $0x10] sm:$0xff] %v1370
        %1377 = vst [vmem:[%s255 + $0x18] sm:$0xff] %v1372
        %s1378 = sand.u32 %s123, 1
        %s1379 = scalar_lea.sflag [#allocation4], %s1378
        %s1380 = sand.u32 %s123, 1
        %s1381 = smul.addr %s1380, 32
        %s1382 = scalar_lea.vmem [#allocation7], %s1381
        // Predicated region
        $region41: #{linear_pallas.1} parent=31 // pred_check
          %p1383 = pneg %p133
        $region42: #{linear_pallas.1} parent=31 // pred_check_branch
          %1385 = sbr.rel (%p1383) target = $region44
        $region43: #{linear_pallas.1} parent=31 // pred_region
          %s1386 = smul.u32 4, %s28
          %s1388 = ssub.s32 512, 512
          %1389 = vsyncadd %s1379, %s1388
          %s1390 = smul.addr %s27, 8
          %s1391 = sadd.s32 %s1386, %s1390
          %s1392 = smul.addr %s1391, 128
          %s1393 = scalar_lea.hbm %s3, %s1392
          %s1395 = sshll.u32 %s1382, 4
          %s1396 = int_to_ptr.vmem [resolvable:$true] %s1395
          %1398 = dma.vmem_to_hbm [thread:$0]  %s1396, 512, %s1393, %s1379
        $region44: #{linear_pallas.1} parent=31 // pred_fallthru
          _
      $region32: #{linear_pallas.1} parent=5 // pred_fallthru
        _
      %p1399 = scmp.le.s32.totalorder 2, %s18
      // Predicated region
      $region45: #{linear_pallas.1} parent=5 // pred_check
        %p1400 = pneg %p1399
      $region46: #{linear_pallas.1} parent=5 // pred_check_branch
        %1402 = sbr.rel (%p1400) target = $region48
      $region47: #{linear_pallas.1} parent=5 // pred_region
        %s1403 = ssub.s32 %s18, 2
        // Predicated region
        $region49: #{linear_pallas.1} parent=47 // pred_check
          %p1404 = pneg %p139
        $region50: #{linear_pallas.1} parent=47 // pred_check_branch
          %1406 = sbr.rel (%p1404) target = $region52
        $region51: #{linear_pallas.1} parent=47 // pred_region
          %s1407 = sand.u32 %s124, 1
          %s1408 = scalar_lea.sflag [#allocation4], %s1407
          %s1409 = sand.u32 %s124, 1
          %s1410 = smul.addr %s1409, 32
          %s1411 = scalar_lea.vmem [#allocation7], %s1410
          %1412 = dma.done %s1408, 512
        $region52: #{linear_pallas.1} parent=47 // pred_fallthru
          _
      $region48: #{linear_pallas.1} parent=5 // pred_fallthru
        _
    $region6: #{linear_pallas.1} parent=1 // loop_footer
      %s22 = sadd.s32 1, %s18
    $region7: #{linear_pallas.1} parent=1 // loop_footer_branch
      %17 = sbr.rel target = $region3
    $region8: #{linear_pallas.1} parent=1 // loop_exit
      _
    %1413 = vsyncpa [#allocation3], 1
    %s1414 = scalar_lea.sflag [#allocation3], 1
    %1415 = vsyncpa %s1414, 1
    %1416 = vsyncpa [#allocation6], 1
    %s1417 = scalar_lea.sflag [#allocation6], 1
    %1418 = vsyncpa %s1417, 1
    %1419 = vsyncpa [#allocation4], 1
    %s1420 = scalar_lea.sflag [#allocation4], 1
    %1421 = vsyncpa %s1420, 1

</llo_original>
